<compile_context>
chip_gen: v7x
topology: tpu7x:2x2x1
jax: 0.10.0
libtpu: 0.0.40
codegen_flags: <defaults>
</compile_context>

<pallas_src>
import functools

import jax
import jax.numpy as jnp
from jax.experimental import pallas as pl
from jax.experimental.pallas import tpu as pltpu


LANE = 128      # lane width: feature / hidden dims padded to multiples of this
TILE_N = 128    # node tile (dst rows and src contraction), multiple of (8, 128)
SUBLANE = 8


def _round_up(x, m):
    return (x + m - 1) // m * m


# ----------------------------------------------------------------------------
# Pallas kernel: one fused GIN layer (aggregation + 2-layer MLP [+ add-pool])
#   grid = (view, row_tile, src_tile); src is the contraction axis (innermost).
# ----------------------------------------------------------------------------
def _gin_layer_kernel(*refs, with_pool):
    if with_pool:
        (h_in, adj, pool, w_a, b_a, w_b, b_b, h_out, g_out, acc) = refs
    else:
        (h_in, adj, w_a, b_a, w_b, b_b, h_out, acc) = refs

    r = pl.program_id(1)
    s = pl.program_id(2)
    last_s = pl.num_programs(2) - 1

    @pl.when(s == 0)
    def _():
        acc[...] = jnp.zeros_like(acc)

    if with_pool:
        @pl.when(jnp.logical_and(r == 0, s == 0))
        def _():
            g_out[...] = jnp.zeros_like(g_out)

    # Neighborhood aggregation, self-loop already folded into A (A + I):
    #   acc += A[r_tile, s_tile] @ h_in[view, s_tile]
    # Adjacency is stored bf16 (exact 0/1); widen to f32 so accumulation and
    # all elementwise math stay exact f32.
    a = adj[...].astype(jnp.float32)
    acc[...] += jnp.dot(a, h_in[...], preferred_element_type=jnp.float32)

    @pl.when(s == last_s)
    def _():
        h = jnp.dot(acc[...], w_a[...], preferred_element_type=jnp.float32) + b_a[...]
        h = jnp.maximum(h, 0.0)
        h = jnp.dot(h, w_b[...], preferred_element_type=jnp.float32) + b_b[...]
        h = jnp.maximum(h, 0.0)
        h_out[...] = h
        if with_pool:
            p = pool[...].astype(jnp.float32)
            g_out[...] += jnp.dot(p, h, preferred_element_type=jnp.float32)


def gin_layer_pallas(h_in, adj, w_a, b_a, w_b, b_b, pool=None,
                     *, tile_r=TILE_N, tile_s=TILE_N):
    """One GIN layer for both views at once.  Returns h_out (and g if pool)."""
    v, n, d_in = h_in.shape
    d_out = w_a.shape[1]
    grid = (v, n // tile_r, n // tile_s)

    in_specs = [
        pl.BlockSpec((None, tile_s, d_in), lambda vi, ri, si: (vi, si, 0)),  # h_in (src)
        pl.BlockSpec((tile_r, tile_s), lambda vi, ri, si: (ri, si)),         # A + I
    ]
    operands = [h_in, adj]
    if pool is not None:
        g_num = pool.shape[0]
        in_specs.append(pl.BlockSpec((g_num, tile_r), lambda vi, ri, si: (0, ri)))
        operands.append(pool)
    in_specs += [
        pl.BlockSpec((d_in, d_out), lambda vi, ri, si: (0, 0)),
        pl.BlockSpec((1, d_out), lambda vi, ri, si: (0, 0)),
        pl.BlockSpec((d_out, d_out), lambda vi, ri, si: (0, 0)),
        pl.BlockSpec((1, d_out), lambda vi, ri, si: (0, 0)),
    ]
    operands += [w_a, b_a, w_b, b_b]

    out_shape = [jax.ShapeDtypeStruct((v, n, d_out), jnp.float32)]
    out_specs = [pl.BlockSpec((None, tile_r, d_out), lambda vi, ri, si: (vi, ri, 0))]
    if pool is not None:
        out_shape.append(jax.ShapeDtypeStruct((v, g_num, d_out), jnp.float32))
        out_specs.append(
            pl.BlockSpec((None, g_num, d_out), lambda vi, ri, si: (vi, 0, 0)))

    kernel = functools.partial(_gin_layer_kernel, with_pool=pool is not None)

    outs = pl.pallas_call(
        kernel,
        out_shape=tuple(out_shape),
        grid_spec=pltpu.PrefetchScalarGridSpec(
            num_scalar_prefetch=0,
            grid=grid,
            in_specs=in_specs,
            out_specs=tuple(out_specs),
            scratch_shapes=[pltpu.VMEM((tile_r, d_in), jnp.float32)],
        ),
        compiler_params=pltpu.CompilerParams(
            dimension_semantics=("parallel", "arbitrary", "arbitrary"),
            vmem_limit_bytes=32 * 1024 * 1024,
        ),
    )(*operands)

    if not isinstance(outs, (tuple, list)):
        outs = (outs,)
    if pool is None:
        return outs[0]
    return outs[0], outs[1]


# ----------------------------------------------------------------------------
# Encoder.forward equivalent (glue in plain JAX: densify, pad, augment, slice).
# ----------------------------------------------------------------------------
def encoder_forward(x, edge_index, batch, params, num_graphs):
    """Mirror of Encoder.forward: returns (z1, z2, g1, g2)."""
    n, f = x.shape
    hidden = params["w1b"].shape[0]

    f_pad = _round_up(f, LANE)
    h_pad = _round_up(hidden, LANE)
    n_pad = _round_up(n, TILE_N)
    g_pad = _round_up(num_graphs, SUBLANE)

    # Densify graph structure; fold GIN self-term (eps=0) as A + I; bf16 (0/1 exact).
    src, dst = edge_index[0], edge_index[1]
    adj = jnp.zeros((n_pad, n_pad), jnp.float32).at[dst, src].set(1.0)
    adj = (adj + jnp.eye(n_pad, dtype=jnp.float32)).astype(jnp.bfloat16)
    # TODO(synk): duplicate edges are collapsed by .set (edge multiplicity dropped).

    pool = jnp.zeros((g_pad, n_pad), jnp.float32)
    pool = pool.at[batch, jnp.arange(n)].set(1.0).astype(jnp.bfloat16)

    # Augmentor pair: (Identity, deterministic FeatureMasking), fused as two views.
    # TODO(synk): original augmentors may also perturb edge_index (edge dropping);
    # only the feature-level augmentation is modelled.
    x_p = jnp.zeros((n_pad, f_pad), jnp.float32).at[:n, :f].set(x)
    mask2 = jnp.zeros((1, f_pad), jnp.float32).at[:, :f].set(params["feat_mask"])
    x_views = jnp.stack([x_p, x_p * mask2], axis=0)          # [2, n_pad, f_pad]

    # Zero-pad weights / biases to lane-aligned shapes.
    def pad2(w, rows, cols):
        return jnp.zeros((rows, cols), jnp.float32).at[:w.shape[0], :w.shape[1]].set(w)

    w1a = pad2(params["w1a"], f_pad, h_pad); b1a = pad2(params["b1a"], 1, h_pad)
    w1b = pad2(params["w1b"], h_pad, h_pad); b1b = pad2(params["b1b"], 1, h_pad)
    w2a = pad2(params["w2a"], h_pad, h_pad); b2a = pad2(params["b2a"], 1, h_pad)
    w2b = pad2(params["w2b"], h_pad, h_pad); b2b = pad2(params["b2b"], 1, h_pad)

    # --- GIN layer 1 (both views) ---
    h1 = gin_layer_pallas(x_views, adj, w1a, b1a, w1b, b1b)
    # --- GIN layer 2 (both views) + fused global add-pool ---
    z, g = gin_layer_pallas(h1, adj, w2a, b2a, w2b, b2b, pool=pool)

    z1 = z[0, :n, :hidden]
    z2 = z[1, :n, :hidden]
    g1 = g[0, :num_graphs, :hidden]
    g2 = g[1, :num_graphs, :hidden]
    return z1, z2, g1, g2


def make_params(key, f_in, hidden):
    ks = jax.random.split(key, 9)
    s = 0.1
    return {
        "w1a": s * jax.random.normal(ks[0], (f_in, hidden), jnp.float32),
        "b1a": s * jax.random.normal(ks[1], (1, hidden), jnp.float32),
        "w1b": s * jax.random.normal(ks[2], (hidden, hidden), jnp.float32),
        "b1b": s * jax.random.normal(ks[3], (1, hidden), jnp.float32),
        "w2a": s * jax.random.normal(ks[4], (hidden, hidden), jnp.float32),
        "b2a": s * jax.random.normal(ks[5], (1, hidden), jnp.float32),
        "w2b": s * jax.random.normal(ks[6], (hidden, hidden), jnp.float32),
        "b2b": s * jax.random.normal(ks[7], (1, hidden), jnp.float32),
        # deterministic feature-masking augmentation (keep-prob ~ 0.7)
        "feat_mask": (jax.random.uniform(ks[8], (1, f_in)) > 0.3).astype(jnp.float32),
    }


# Pure-JAX reference of the same forward (correctness check).
def _reference_forward(x, edge_index, batch, params, num_graphs):
    n = x.shape[0]
    src, dst = edge_index[0], edge_index[1]
    adj = jnp.zeros((n, n), jnp.float32).at[dst, src].set(1.0)
    pool = jnp.zeros((num_graphs, n), jnp.float32).at[batch, jnp.arange(n)].set(1.0)

    def enc(xin):
        h = adj @ xin + xin
        h = jnp.maximum(h @ params["w1a"] + params["b1a"], 0.0)
        h = jnp.maximum(h @ params["w1b"] + params["b1b"], 0.0)
        h2 = adj @ h + h
        h2 = jnp.maximum(h2 @ params["w2a"] + params["b2a"], 0.0)
        h2 = jnp.maximum(h2 @ params["w2b"] + params["b2b"], 0.0)
        return h2, pool @ h2

    z1, g1 = enc(x)
    z2, g2 = enc(x * params["feat_mask"])
    return z1, z2, g1, g2


if __name__ == "__main__":
    key = jax.random.PRNGKey(0)
    k_x, k_p = jax.random.split(key)

    # 4 ring graphs of 50 nodes each: N=200 (pads to 256 -> a real 2x2 tile grid).
    NODES_PER_G, G = 50, 4
    N = NODES_PER_G * G
    F_IN, HIDDEN = 32, 64

    x = jax.random.normal(k_x, (N, F_IN), jnp.float32)
    batch = jnp.repeat(jnp.arange(G, dtype=jnp.int32), NODES_PER_G)

    def ring(offset):
        s = jnp.arange(NODES_PER_G, dtype=jnp.int32) + offset
        d = (jnp.arange(NODES_PER_G, dtype=jnp.int32) + 1) % NODES_PER_G + offset
        return jnp.stack([jnp.concatenate([s, d]), jnp.concatenate([d, s])])

    edge_index = jnp.concatenate(
        [ring(i * NODES_PER_G) for i in range(G)], axis=1).astype(jnp.int32)

    params = make_params(k_p, F_IN, HIDDEN)

    fwd = jax.jit(functools.partial(encoder_forward, num_graphs=G))
    z1, z2, g1, g2 = fwd(x, edge_index, batch, params)
    jax.block_until_ready((z1, z2, g1, g2))

    # sanity check vs pure-JAX reference
    rz1, rz2, rg1, rg2 = _reference_forward(x, edge_index, batch, params, G)
    for a, b in ((z1, rz1), (z2, rz2), (g1, rg1), (g2, rg2)):
        assert jnp.allclose(a, b, atol=2e-4, rtol=2e-4), "mismatch vs reference"

    assert z1.shape == (N, HIDDEN) and g1.shape == (G, HIDDEN)
    print("KERNEL_OK")
</pallas_src>

<mosaic_0001>
module attributes {stable_mosaic.version = 11 : i64} {
  func.func @_gin_layer_kernel(%arg0: i32, %arg1: i32, %arg2: i32, %arg3: memref<1x128x128xf32, #tpu.memory_space<vmem>>, %arg4: memref<128x128xbf16, #tpu.memory_space<vmem>>, %arg5: memref<128x128xf32, #tpu.memory_space<vmem>>, %arg6: memref<1x128xf32, #tpu.memory_space<vmem>>, %arg7: memref<128x128xf32, #tpu.memory_space<vmem>>, %arg8: memref<1x128xf32, #tpu.memory_space<vmem>>, %arg9: memref<1x128x128xf32, #tpu.memory_space<vmem>>, %arg10: memref<128x128xf32, #tpu.memory_space<vmem>>) attributes {dimension_semantics = [#tpu.dimension_semantics<parallel>, #tpu.dimension_semantics<arbitrary>, #tpu.dimension_semantics<arbitrary>], iteration_bounds = array<i64: 2, 2, 2>, scalar_prefetch = 0 : i64, scratch_operands = 1 : i64, tpu.core_type = #tpu.core_type<tc>, window_params = [{transform_indices = @transform_0, window_bounds = array<i64: 1, 128, 128>}, {transform_indices = @transform_1, window_bounds = array<i64: 128, 128>}, {pipeline_mode = #tpu.pipeline_mode<synchronous>, transform_indices = @transform_2, window_bounds = array<i64: 128, 128>}, {pipeline_mode = #tpu.pipeline_mode<synchronous>, transform_indices = @transform_3, window_bounds = array<i64: 1, 128>}, {pipeline_mode = #tpu.pipeline_mode<synchronous>, transform_indices = @transform_4, window_bounds = array<i64: 128, 128>}, {pipeline_mode = #tpu.pipeline_mode<synchronous>, transform_indices = @transform_5, window_bounds = array<i64: 1, 128>}, {transform_indices = @transform_6, window_bounds = array<i64: 1, 128, 128>}]} {
    %c0_i32 = arith.constant 0 : i32
    %0 = arith.cmpi eq, %arg2, %c0_i32 : i32
    %1 = arith.extui %0 : i1 to i32
    %c0_i32_0 = arith.constant 0 : i32
    %2 = arith.cmpi ne, %1, %c0_i32_0 : i32
    scf.if %2 {
      %cst_10 = arith.constant 0.000000e+00 : f32
      %14 = vector.broadcast %cst_10 : f32 to vector<128x128xf32>
      %c0_11 = arith.constant 0 : index
      %c0_12 = arith.constant 0 : index
      %15 = vector.load %arg10[%c0_11, %c0_12] : memref<128x128xf32, #tpu.memory_space<vmem>>, vector<128x128xf32>
      tpu.vector_store %arg10[%c0_11, %c0_12], %14 {strides = array<i32>} : memref<128x128xf32, #tpu.memory_space<vmem>>, vector<128x128xf32>,
    } else {
    }
    %c0 = arith.constant 0 : index
    %c0_1 = arith.constant 0 : index
    %3 = vector.load %arg4[%c0, %c0_1] : memref<128x128xbf16, #tpu.memory_space<vmem>>, vector<128x128xbf16>
    %4 = arith.extf %3 : vector<128x128xbf16> to vector<128x128xf32>
    %c0_2 = arith.constant 0 : index
    %c0_3 = arith.constant 0 : index
    %5 = vector.load %arg10[%c0_2, %c0_3] : memref<128x128xf32, #tpu.memory_space<vmem>>, vector<128x128xf32>
    %c0_4 = arith.constant 0 : index
    %c0_5 = arith.constant 0 : index
    %c0_6 = arith.constant 0 : index
    %6 = vector.load %arg3[%c0_4, %c0_5, %c0_6] : memref<1x128x128xf32, #tpu.memory_space<vmem>>, vector<1x128x128xf32>
    %7 = vector.shape_cast %6 : vector<1x128x128xf32> to vector<128x128xf32>
    %cst = arith.constant dense<0.000000e+00> : vector<128x128xf32>
    %8 = tpu.matmul %4, %7, %cst {dimension_numbers = #tpu.dot_dimension_numbers<[1], [0], [0], [1], [0, 0, 1, 1], [], []>} : vector<128x128xf32>, vector<128x128xf32>, vector<128x128xf32> -> vector<128x128xf32>
    %9 = arith.addf %5, %8 : vector<128x128xf32>
    %c0_7 = arith.constant 0 : index
    %c0_8 = arith.constant 0 : index
    %10 = vector.load %arg10[%c0_7, %c0_8] : memref<128x128xf32, #tpu.memory_space<vmem>>, vector<128x128xf32>
    tpu.vector_store %arg10[%c0_7, %c0_8], %9 {strides = array<i32>} : memref<128x128xf32, #tpu.memory_space<vmem>>, vector<128x128xf32>,
    %c1_i32 = arith.constant 1 : i32
    %11 = arith.cmpi eq, %arg2, %c1_i32 : i32
    %12 = arith.extui %11 : i1 to i32
    %c0_i32_9 = arith.constant 0 : i32
    %13 = arith.cmpi ne, %12, %c0_i32_9 : i32
    scf.if %13 {
      %c0_10 = arith.constant 0 : index
      %c0_11 = arith.constant 0 : index
      %14 = vector.load %arg10[%c0_10, %c0_11] : memref<128x128xf32, #tpu.memory_space<vmem>>, vector<128x128xf32>
      %c0_12 = arith.constant 0 : index
      %c0_13 = arith.constant 0 : index
      %15 = vector.load %arg5[%c0_12, %c0_13] : memref<128x128xf32, #tpu.memory_space<vmem>>, vector<128x128xf32>
      %cst_14 = arith.constant dense<0.000000e+00> : vector<128x128xf32>
      %16 = tpu.matmul %14, %15, %cst_14 {dimension_numbers = #tpu.dot_dimension_numbers<[1], [0], [0], [1], [0, 0, 1, 1], [], []>} : vector<128x128xf32>, vector<128x128xf32>, vector<128x128xf32> -> vector<128x128xf32>
      %c0_15 = arith.constant 0 : index
      %c0_16 = arith.constant 0 : index
      %17 = vector.load %arg6[%c0_15, %c0_16] : memref<1x128xf32, #tpu.memory_space<vmem>>, vector<1x128xf32>
      %18 = vector.broadcast %17 : vector<1x128xf32> to vector<128x128xf32>
      %19 = arith.addf %16, %18 : vector<128x128xf32>
      %cst_17 = arith.constant 0.000000e+00 : f32
      %20 = vector.broadcast %cst_17 : f32 to vector<128x128xf32>
      %21 = arith.maximumf %19, %20 : vector<128x128xf32>
      %c0_18 = arith.constant 0 : index
      %c0_19 = arith.constant 0 : index
      %22 = vector.load %arg7[%c0_18, %c0_19] : memref<128x128xf32, #tpu.memory_space<vmem>>, vector<128x128xf32>
      %cst_20 = arith.constant dense<0.000000e+00> : vector<128x128xf32>
      %23 = tpu.matmul %21, %22, %cst_20 {dimension_numbers = #tpu.dot_dimension_numbers<[1], [0], [0], [1], [0, 0, 1, 1], [], []>} : vector<128x128xf32>, vector<128x128xf32>, vector<128x128xf32> -> vector<128x128xf32>
      %c0_21 = arith.constant 0 : index
      %c0_22 = arith.constant 0 : index
      %24 = vector.load %arg8[%c0_21, %c0_22] : memref<1x128xf32, #tpu.memory_space<vmem>>, vector<1x128xf32>
      %25 = vector.broadcast %24 : vector<1x128xf32> to vector<128x128xf32>
      %26 = arith.addf %23, %25 : vector<128x128xf32>
      %cst_23 = arith.constant 0.000000e+00 : f32
      %27 = vector.broadcast %cst_23 : f32 to vector<128x128xf32>
      %28 = arith.maximumf %26, %27 : vector<128x128xf32>
      %c0_24 = arith.constant 0 : index
      %c0_25 = arith.constant 0 : index
      %c0_26 = arith.constant 0 : index
      %29 = vector.load %arg9[%c0_24, %c0_25, %c0_26] : memref<1x128x128xf32, #tpu.memory_space<vmem>>, vector<1x128x128xf32>
      %30 = vector.shape_cast %29 : vector<1x128x128xf32> to vector<128x128xf32>
      %31 = vector.shape_cast %28 : vector<128x128xf32> to vector<1x128x128xf32>
      tpu.vector_store %arg9[%c0_24, %c0_25, %c0_26], %31 {strides = array<i32>} : memref<1x128x128xf32, #tpu.memory_space<vmem>>, vector<1x128x128xf32>,
    } else {
    }
    return
  }
  func.func @transform_0(%arg0: i32, %arg1: i32, %arg2: i32) -> (i32, i32, i32) {
    %c0_i32 = arith.constant 0 : i32
    %c0_i32_0 = arith.constant 0 : i32
    return %arg0, %arg2, %c0_i32 : i32, i32, i32
  }
  func.func @transform_1(%arg0: i32, %arg1: i32, %arg2: i32) -> (i32, i32) {
    %c0_i32 = arith.constant 0 : i32
    return %arg1, %arg2 : i32, i32
  }
  func.func @transform_2(%arg0: i32, %arg1: i32, %arg2: i32) -> (i32, i32) {
    %c0_i32 = arith.constant 0 : i32
    %c0_i32_0 = arith.constant 0 : i32
    %c0_i32_1 = arith.constant 0 : i32
    return %c0_i32, %c0_i32_0 : i32, i32
  }
  func.func @transform_3(%arg0: i32, %arg1: i32, %arg2: i32) -> (i32, i32) {
    %c0_i32 = arith.constant 0 : i32
    %c0_i32_0 = arith.constant 0 : i32
    %c0_i32_1 = arith.constant 0 : i32
    return %c0_i32, %c0_i32_0 : i32, i32
  }
  func.func @transform_4(%arg0: i32, %arg1: i32, %arg2: i32) -> (i32, i32) {
    %c0_i32 = arith.constant 0 : i32
    %c0_i32_0 = arith.constant 0 : i32
    %c0_i32_1 = arith.constant 0 : i32
    return %c0_i32, %c0_i32_0 : i32, i32
  }
  func.func @transform_5(%arg0: i32, %arg1: i32, %arg2: i32) -> (i32, i32) {
    %c0_i32 = arith.constant 0 : i32
    %c0_i32_0 = arith.constant 0 : i32
    %c0_i32_1 = arith.constant 0 : i32
    return %c0_i32, %c0_i32_0 : i32, i32
  }
  func.func @transform_6(%arg0: i32, %arg1: i32, %arg2: i32) -> (i32, i32, i32) {
    %c0_i32 = arith.constant 0 : i32
    %c0_i32_0 = arith.constant 0 : i32
    return %arg0, %arg1, %c0_i32 : i32, i32, i32
  }
}

module attributes {stable_mosaic.version = 11 : i64} {
  func.func @_gin_layer_kernel(%arg0: i32, %arg1: i32, %arg2: i32, %arg3: memref<1x128x128xf32, #tpu.memory_space<vmem>>, %arg4: memref<128x128xbf16, #tpu.memory_space<vmem>>, %arg5: memref<8x128xbf16, #tpu.memory_space<vmem>>, %arg6: memref<128x128xf32, #tpu.memory_space<vmem>>, %arg7: memref<1x128xf32, #tpu.memory_space<vmem>>, %arg8: memref<128x128xf32, #tpu.memory_space<vmem>>, %arg9: memref<1x128xf32, #tpu.memory_space<vmem>>, %arg10: memref<1x128x128xf32, #tpu.memory_space<vmem>>, %arg11: memref<1x8x128xf32, #tpu.memory_space<vmem>>, %arg12: memref<128x128xf32, #tpu.memory_space<vmem>>) attributes {dimension_semantics = [#tpu.dimension_semantics<parallel>, #tpu.dimension_semantics<arbitrary>, #tpu.dimension_semantics<arbitrary>], iteration_bounds = array<i64: 2, 2, 2>, scalar_prefetch = 0 : i64, scratch_operands = 1 : i64, tpu.core_type = #tpu.core_type<tc>, window_params = [{transform_indices = @transform_0, window_bounds = array<i64: 1, 128, 128>}, {transform_indices = @transform_1, window_bounds = array<i64: 128, 128>}, {transform_indices = @transform_2, window_bounds = array<i64: 8, 128>}, {pipeline_mode = #tpu.pipeline_mode<synchronous>, transform_indices = @transform_3, window_bounds = array<i64: 128, 128>}, {pipeline_mode = #tpu.pipeline_mode<synchronous>, transform_indices = @transform_4, window_bounds = array<i64: 1, 128>}, {pipeline_mode = #tpu.pipeline_mode<synchronous>, transform_indices = @transform_5, window_bounds = array<i64: 128, 128>}, {pipeline_mode = #tpu.pipeline_mode<synchronous>, transform_indices = @transform_6, window_bounds = array<i64: 1, 128>}, {transform_indices = @transform_7, window_bounds = array<i64: 1, 128, 128>}, {transform_indices = @transform_8, window_bounds = array<i64: 1, 8, 128>}]} {
    %c0_i32 = arith.constant 0 : i32
    %0 = arith.cmpi eq, %arg2, %c0_i32 : i32
    %1 = arith.extui %0 : i1 to i32
    %c0_i32_0 = arith.constant 0 : i32
    %2 = arith.cmpi ne, %1, %c0_i32_0 : i32
    scf.if %2 {
      %cst_13 = arith.constant 0.000000e+00 : f32
      %19 = vector.broadcast %cst_13 : f32 to vector<128x128xf32>
      %c0_14 = arith.constant 0 : index
      %c0_15 = arith.constant 0 : index
      %20 = vector.load %arg12[%c0_14, %c0_15] : memref<128x128xf32, #tpu.memory_space<vmem>>, vector<128x128xf32>
      tpu.vector_store %arg12[%c0_14, %c0_15], %19 {strides = array<i32>} : memref<128x128xf32, #tpu.memory_space<vmem>>, vector<128x128xf32>,
    } else {
    }
    %c0_i32_1 = arith.constant 0 : i32
    %3 = arith.cmpi eq, %arg1, %c0_i32_1 : i32
    %c0_i32_2 = arith.constant 0 : i32
    %4 = arith.cmpi eq, %arg2, %c0_i32_2 : i32
    %5 = arith.andi %3, %4 : i1
    %6 = arith.extui %5 : i1 to i32
    %c0_i32_3 = arith.constant 0 : i32
    %7 = arith.cmpi ne, %6, %c0_i32_3 : i32
    scf.if %7 {
      %cst_13 = arith.constant 0.000000e+00 : f32
      %19 = vector.broadcast %cst_13 : f32 to vector<8x128xf32>
      %c0_14 = arith.constant 0 : index
      %c0_15 = arith.constant 0 : index
      %c0_16 = arith.constant 0 : index
      %20 = vector.load %arg11[%c0_14, %c0_15, %c0_16] : memref<1x8x128xf32, #tpu.memory_space<vmem>>, vector<1x8x128xf32>
      %21 = vector.shape_cast %20 : vector<1x8x128xf32> to vector<8x128xf32>
      %22 = vector.shape_cast %19 : vector<8x128xf32> to vector<1x8x128xf32>
      tpu.vector_store %arg11[%c0_14, %c0_15, %c0_16], %22 {strides = array<i32>} : memref<1x8x128xf32, #tpu.memory_space<vmem>>, vector<1x8x128xf32>,
    } else {
    }
    %c0 = arith.constant 0 : index
    %c0_4 = arith.constant 0 : index
    %8 = vector.load %arg4[%c0, %c0_4] : memref<128x128xbf16, #tpu.memory_space<vmem>>, vector<128x128xbf16>
    %9 = arith.extf %8 : vector<128x128xbf16> to vector<128x128xf32>
    %c0_5 = arith.constant 0 : index
    %c0_6 = arith.constant 0 : index
    %10 = vector.load %arg12[%c0_5, %c0_6] : memref<128x128xf32, #tpu.memory_space<vmem>>, vector<128x128xf32>
    %c0_7 = arith.constant 0 : index
    %c0_8 = arith.constant 0 : index
    %c0_9 = arith.constant 0 : index
    %11 = vector.load %arg3[%c0_7, %c0_8, %c0_9] : memref<1x128x128xf32, #tpu.memory_space<vmem>>, vector<1x128x128xf32>
    %12 = vector.shape_cast %11 : vector<1x128x128xf32> to vector<128x128xf32>
    %cst = arith.constant dense<0.000000e+00> : vector<128x128xf32>
    %13 = tpu.matmul %9, %12, %cst {dimension_numbers = #tpu.dot_dimension_numbers<[1], [0], [0], [1], [0, 0, 1, 1], [], []>} : vector<128x128xf32>, vector<128x128xf32>, vector<128x128xf32> -> vector<128x128xf32>
    %14 = arith.addf %10, %13 : vector<128x128xf32>
    %c0_10 = arith.constant 0 : index
    %c0_11 = arith.constant 0 : index
    %15 = vector.load %arg12[%c0_10, %c0_11] : memref<128x128xf32, #tpu.memory_space<vmem>>, vector<128x128xf32>
    tpu.vector_store %arg12[%c0_10, %c0_11], %14 {strides = array<i32>} : memref<128x128xf32, #tpu.memory_space<vmem>>, vector<128x128xf32>,
    %c1_i32 = arith.constant 1 : i32
    %16 = arith.cmpi eq, %arg2, %c1_i32 : i32
    %17 = arith.extui %16 : i1 to i32
    %c0_i32_12 = arith.constant 0 : i32
    %18 = arith.cmpi ne, %17, %c0_i32_12 : i32
    scf.if %18 {
      %c0_13 = arith.constant 0 : index
      %c0_14 = arith.constant 0 : index
      %19 = vector.load %arg12[%c0_13, %c0_14] : memref<128x128xf32, #tpu.memory_space<vmem>>, vector<128x128xf32>
      %c0_15 = arith.constant 0 : index
      %c0_16 = arith.constant 0 : index
      %20 = vector.load %arg6[%c0_15, %c0_16] : memref<128x128xf32, #tpu.memory_space<vmem>>, vector<128x128xf32>
      %cst_17 = arith.constant dense<0.000000e+00> : vector<128x128xf32>
      %21 = tpu.matmul %19, %20, %cst_17 {dimension_numbers = #tpu.dot_dimension_numbers<[1], [0], [0], [1], [0, 0, 1, 1], [], []>} : vector<128x128xf32>, vector<128x128xf32>, vector<128x128xf32> -> vector<128x128xf32>
      %c0_18 = arith.constant 0 : index
      %c0_19 = arith.constant 0 : index
      %22 = vector.load %arg7[%c0_18, %c0_19] : memref<1x128xf32, #tpu.memory_space<vmem>>, vector<1x128xf32>
      %23 = vector.broadcast %22 : vector<1x128xf32> to vector<128x128xf32>
      %24 = arith.addf %21, %23 : vector<128x128xf32>
      %cst_20 = arith.constant 0.000000e+00 : f32
      %25 = vector.broadcast %cst_20 : f32 to vector<128x128xf32>
      %26 = arith.maximumf %24, %25 : vector<128x128xf32>
      %c0_21 = arith.constant 0 : index
      %c0_22 = arith.constant 0 : index
      %27 = vector.load %arg8[%c0_21, %c0_22] : memref<128x128xf32, #tpu.memory_space<vmem>>, vector<128x128xf32>
      %cst_23 = arith.constant dense<0.000000e+00> : vector<128x128xf32>
      %28 = tpu.matmul %26, %27, %cst_23 {dimension_numbers = #tpu.dot_dimension_numbers<[1], [0], [0], [1], [0, 0, 1, 1], [], []>} : vector<128x128xf32>, vector<128x128xf32>, vector<128x128xf32> -> vector<128x128xf32>
      %c0_24 = arith.constant 0 : index
      %c0_25 = arith.constant 0 : index
      %29 = vector.load %arg9[%c0_24, %c0_25] : memref<1x128xf32, #tpu.memory_space<vmem>>, vector<1x128xf32>
      %30 = vector.broadcast %29 : vector<1x128xf32> to vector<128x128xf32>
      %31 = arith.addf %28, %30 : vector<128x128xf32>
      %cst_26 = arith.constant 0.000000e+00 : f32
      %32 = vector.broadcast %cst_26 : f32 to vector<128x128xf32>
      %33 = arith.maximumf %31, %32 : vector<128x128xf32>
      %c0_27 = arith.constant 0 : index
      %c0_28 = arith.constant 0 : index
      %c0_29 = arith.constant 0 : index
      %34 = vector.load %arg10[%c0_27, %c0_28, %c0_29] : memref<1x128x128xf32, #tpu.memory_space<vmem>>, vector<1x128x128xf32>
      %35 = vector.shape_cast %34 : vector<1x128x128xf32> to vector<128x128xf32>
      %36 = vector.shape_cast %33 : vector<128x128xf32> to vector<1x128x128xf32>
      tpu.vector_store %arg10[%c0_27, %c0_28, %c0_29], %36 {strides = array<i32>} : memref<1x128x128xf32, #tpu.memory_space<vmem>>, vector<1x128x128xf32>,
      %c0_30 = arith.constant 0 : index
      %c0_31 = arith.constant 0 : index
      %37 = vector.load %arg5[%c0_30, %c0_31] : memref<8x128xbf16, #tpu.memory_space<vmem>>, vector<8x128xbf16>
      %38 = arith.extf %37 : vector<8x128xbf16> to vector<8x128xf32>
      %c0_32 = arith.constant 0 : index
      %c0_33 = arith.constant 0 : index
      %c0_34 = arith.constant 0 : index
      %39 = vector.load %arg11[%c0_32, %c0_33, %c0_34] : memref<1x8x128xf32, #tpu.memory_space<vmem>>, vector<1x8x128xf32>
      %40 = vector.shape_cast %39 : vector<1x8x128xf32> to vector<8x128xf32>
      %cst_35 = arith.constant dense<0.000000e+00> : vector<8x128xf32>
      %41 = tpu.matmul %38, %33, %cst_35 {dimension_numbers = #tpu.dot_dimension_numbers<[1], [0], [0], [1], [0, 0, 1, 1], [], []>} : vector<8x128xf32>, vector<128x128xf32>, vector<8x128xf32> -> vector<8x128xf32>
      %42 = arith.addf %40, %41 : vector<8x128xf32>
      %c0_36 = arith.constant 0 : index
      %c0_37 = arith.constant 0 : index
      %c0_38 = arith.constant 0 : index
      %43 = vector.load %arg11[%c0_36, %c0_37, %c0_38] : memref<1x8x128xf32, #tpu.memory_space<vmem>>, vector<1x8x128xf32>
      %44 = vector.shape_cast %43 : vector<1x8x128xf32> to vector<8x128xf32>
      %45 = vector.shape_cast %42 : vector<8x128xf32> to vector<1x8x128xf32>
      tpu.vector_store %arg11[%c0_36, %c0_37, %c0_38], %45 {strides = array<i32>} : memref<1x8x128xf32, #tpu.memory_space<vmem>>, vector<1x8x128xf32>,
    } else {
    }
    return
  }
  func.func @transform_0(%arg0: i32, %arg1: i32, %arg2: i32) -> (i32, i32, i32) {
    %c0_i32 = arith.constant 0 : i32
    %c0_i32_0 = arith.constant 0 : i32
    return %arg0, %arg2, %c0_i32 : i32, i32, i32
  }
  func.func @transform_1(%arg0: i32, %arg1: i32, %arg2: i32) -> (i32, i32) {
    %c0_i32 = arith.constant 0 : i32
    return %arg1, %arg2 : i32, i32
  }
  func.func @transform_2(%arg0: i32, %arg1: i32, %arg2: i32) -> (i32, i32) {
    %c0_i32 = arith.constant 0 : i32
    %c0_i32_0 = arith.constant 0 : i32
    return %c0_i32, %arg1 : i32, i32
  }
  func.func @transform_3(%arg0: i32, %arg1: i32, %arg2: i32) -> (i32, i32) {
    %c0_i32 = arith.constant 0 : i32
    %c0_i32_0 = arith.constant 0 : i32
    %c0_i32_1 = arith.constant 0 : i32
    return %c0_i32, %c0_i32_0 : i32, i32
  }
  func.func @transform_4(%arg0: i32, %arg1: i32, %arg2: i32) -> (i32, i32) {
    %c0_i32 = arith.constant 0 : i32
    %c0_i32_0 = arith.constant 0 : i32
    %c0_i32_1 = arith.constant 0 : i32
    return %c0_i32, %c0_i32_0 : i32, i32
  }
  func.func @transform_5(%arg0: i32, %arg1: i32, %arg2: i32) -> (i32, i32) {
    %c0_i32 = arith.constant 0 : i32
    %c0_i32_0 = arith.constant 0 : i32
    %c0_i32_1 = arith.constant 0 : i32
    return %c0_i32, %c0_i32_0 : i32, i32
  }
  func.func @transform_6(%arg0: i32, %arg1: i32, %arg2: i32) -> (i32, i32) {
    %c0_i32 = arith.constant 0 : i32
    %c0_i32_0 = arith.constant 0 : i32
    %c0_i32_1 = arith.constant 0 : i32
    return %c0_i32, %c0_i32_0 : i32, i32
  }
  func.func @transform_7(%arg0: i32, %arg1: i32, %arg2: i32) -> (i32, i32, i32) {
    %c0_i32 = arith.constant 0 : i32
    %c0_i32_0 = arith.constant 0 : i32
    return %arg0, %arg1, %c0_i32 : i32, i32, i32
  }
  func.func @transform_8(%arg0: i32, %arg1: i32, %arg2: i32) -> (i32, i32, i32) {
    %c0_i32 = arith.constant 0 : i32
    %c0_i32_0 = arith.constant 0 : i32
    %c0_i32_1 = arith.constant 0 : i32
    return %arg0, %c0_i32, %c0_i32_0 : i32, i32, i32
  }
}

</mosaic_0001>

<llo_original>
// kernel: encoder_forward.3
$region0: #{encoder_forward.3}
  #allocation0 [shape = 'u32[]', space=smem, size = 0x4, offset = 0x4, fixed_abs, tag = 'smem constant byte address 0x4 - core index']
  #allocation1 [shape = 'u32[144,128]{1,0:T(1,128)}', space=vmem, size = 0x12000, scoped, tag = 'internal scratch']
  #allocation2 [shape = 'f32[128,128]{1,0:T(8,128)}', space=vmem, size = 0x10000, scoped, tag = 'scratch operand']
  %s0 = inlined_call_operand.vmem [shape: f32[2,256,128], index: 0, kind: input, shape index: {}]
  %s1 = inlined_call_operand.vmem [shape: bf16[256,256], index: 1, kind: input, shape index: {}]
  %s2 = inlined_call_operand.vmem [shape: bf16[8,256], index: 2, kind: input, shape index: {}]
  %s3 = inlined_call_operand.vmem [shape: f32[128,128], index: 3, kind: input, shape index: {}]
  %s4 = inlined_call_operand.vmem [shape: f32[1,128], index: 4, kind: input, shape index: {}]
  %s5 = inlined_call_operand.vmem [shape: f32[128,128], index: 5, kind: input, shape index: {}]
  %s6 = inlined_call_operand.vmem [shape: f32[1,128], index: 6, kind: input, shape index: {}]
  %s7 = inlined_call_operand.vmem [shape: f32[2,256,128], index: 7, kind: output, shape index: {0}]
  %s8 = inlined_call_operand.vmem [shape: f32[2,8,128], index: 8, kind: output, shape index: {1}]
  %9 = xla_tuple %s7, %s8
  %s10 = sld [smem:[#allocation0]]
  $region122: #{encoder_forward.3} parent=0
    _
  %s12 = ssub.s32 1, %s10
  %s13 = scalar_select 0, %s12, %s10
  $region1: #{encoder_forward.3} parent=0
    #allocation3 [shape = 'u8[65536]{0}', space=vmem, size = 0x10000, scoped, tag = 'input window, operand 1']
    loop: start=0, step=1, limit=10
    $region2: #{encoder_forward.3} parent=1 // loop_pre_header
      _
    $region3: #{encoder_forward.3} parent=1 // loop_header
      %s15 = sphi 0, %s19
      %p16 = scmp.ge.s32.totalorder %s15, 10
      %s22 = sphi 0, %s41
      %s23 = sphi 0, %s37
      %s24 = sphi 0, %s33
      %s25 = sphi 0, %s22
      %s26 = sphi 0, %s23
      %s27 = sphi 0, %s24
      %s28 = sphi 0, %s25
      %s29 = sphi 0, %s26
      %s30 = sphi 0, %s27
      %s46 = sphi 0, %s48
      %s49 = sphi 0, %s46
      %s50 = sphi 0, %s49
      %s66 = sphi 0, %s50
      %s74 = sphi 0, %s76
      %s77 = sphi 0, %s74
      %s78 = sphi 0, %s77
      %s94 = sphi 0, %s78
      %s100 = sphi 0, %s102
      %s103 = sphi 0, %s100
      %s104 = sphi 0, %s103
      %s120 = sphi 0, %s104
      %s124 = sphi 0, %s124
      %s126 = sphi 0, %s124
      %s127 = sphi 0, %s126
      %s141 = sphi 0, %s127
      %s145 = sphi 0, %s145
      %s147 = sphi 0, %s145
      %s148 = sphi 0, %s147
      %s162 = sphi 0, %s148
      %s166 = sphi 0, %s166
      %s168 = sphi 0, %s166
      %s169 = sphi 0, %s168
      %s183 = sphi 0, %s169
      %s187 = sphi 0, %s187
      %s189 = sphi 0, %s187
      %s190 = sphi 0, %s189
      %s204 = sphi 0, %s190
      %s212 = sphi 0, %s214
      %s215 = sphi 0, %s212
      %s216 = sphi 0, %s215
      %s232 = sphi 0, %s216
      %s238 = sphi 0, %s240
      %s241 = sphi 0, %s238
      %s242 = sphi 0, %s241
      %s258 = sphi 0, %s242
    $region4: #{encoder_forward.3} parent=1 // loop_header_branch
      %18 = sbr.rel (%p16) target = $region8
    $region5: #{encoder_forward.3} parent=1 // loop_body
      %s20 = ssub.s32 %s15, 1
      %s21 = ssub.s32 %s15, 2
      %s31 = sadd.s32 1, %s24
      %p32 = scmp.ge.s32.totalorder %s31, 2
      %s33 = scalar_select %p32, 0, %s31
      %s34 = sadd.s32 1, %s23
      %s35 = scalar_select %p32, %s34, %s23
      %p36 = scmp.ge.s32.totalorder %s35, 2
      %s37 = scalar_select %p36, 0, %s35
      %s38 = sadd.s32 1, %s22
      %s39 = scalar_select %p36, %s38, %s22
      %p40 = scmp.ge.s32.totalorder %s39, 2
      %s41 = scalar_select %p40, 0, %s39
      %s42 = ssub.s32 %s22, %s41
      %s43 = ssub.s32 %s24, %s33
      %s44 = sor.u32 %s42, %s43
      %p45 = scmp.eq.s32.totalorder %s44, 0
      %s47 = sadd.s32 %s46, 1
      %s48 = scalar_select %p45, %s46, %s47
      %p51 = pneg %p45
      %p52 = scmp.eq.s32.totalorder %s15, 7
      %p53 = por %p51, %p52
      %p54 = scmp.ne.s32.totalorder %s46, %s49
      %p55 = scmp.eq.s32.totalorder %s15, 0
      %p56 = por %p54, %p55
      %p57 = scmp.ne.s32.totalorder %s46, %s49
      %p58 = scmp.eq.s32.totalorder %s20, 7
      %p59 = por %p57, %p58
      %p60 = scmp.ne.s32.totalorder %s49, %s50
      %p61 = scmp.eq.s32.totalorder %s20, 0
      %p62 = por %p60, %p61
      %p63 = scmp.ne.s32.totalorder %s49, %s50
      %p64 = scmp.eq.s32.totalorder %s21, 7
      %p65 = por %p63, %p64
      %p67 = scmp.ne.s32.totalorder %s50, %s66
      %p68 = scmp.eq.s32.totalorder %s21, 0
      %p69 = por %p67, %p68
      %s70 = ssub.s32 %s23, %s37
      %s71 = ssub.s32 %s24, %s33
      %s72 = sor.u32 %s70, %s71
      %p73 = scmp.eq.s32.totalorder %s72, 0
      %s75 = sadd.s32 %s74, 1
      %s76 = scalar_select %p73, %s74, %s75
      %p79 = pneg %p73
      %p80 = scmp.eq.s32.totalorder %s15, 7
      %p81 = por %p79, %p80
      %p82 = scmp.ne.s32.totalorder %s74, %s77
      %p83 = scmp.eq.s32.totalorder %s15, 0
      %p84 = por %p82, %p83
      %p85 = scmp.ne.s32.totalorder %s74, %s77
      %p86 = scmp.eq.s32.totalorder %s20, 7
      %p87 = por %p85, %p86
      %p88 = scmp.ne.s32.totalorder %s77, %s78
      %p89 = scmp.eq.s32.totalorder %s20, 0
      %p90 = por %p88, %p89
      %p91 = scmp.ne.s32.totalorder %s77, %s78
      %p92 = scmp.eq.s32.totalorder %s21, 7
      %p93 = por %p91, %p92
      %p95 = scmp.ne.s32.totalorder %s78, %s94
      %p96 = scmp.eq.s32.totalorder %s21, 0
      %p97 = por %p95, %p96
      %s98 = ssub.s32 %s23, %s37
      %p99 = scmp.eq.s32.totalorder %s98, 0
      %s101 = sadd.s32 %s100, 1
      %s102 = scalar_select %p99, %s100, %s101
      %p105 = pneg %p99
      %p106 = scmp.eq.s32.totalorder %s15, 7
      %p107 = por %p105, %p106
      %p108 = scmp.ne.s32.totalorder %s100, %s103
      %p109 = scmp.eq.s32.totalorder %s15, 0
      %p110 = por %p108, %p109
      %p111 = scmp.ne.s32.totalorder %s100, %s103
      %p112 = scmp.eq.s32.totalorder %s20, 7
      %p113 = por %p111, %p112
      %p114 = scmp.ne.s32.totalorder %s103, %s104
      %p115 = scmp.eq.s32.totalorder %s20, 0
      %p116 = por %p114, %p115
      %p117 = scmp.ne.s32.totalorder %s103, %s104
      %p118 = scmp.eq.s32.totalorder %s21, 7
      %p119 = por %p117, %p118
      %p121 = scmp.ne.s32.totalorder %s104, %s120
      %p122 = scmp.eq.s32.totalorder %s21, 0
      %p123 = por %p121, %p122
      %s125 = sadd.s32 %s124, 1
      %p128 = scmp.eq.s32.totalorder %s15, 7
      %p129 = scmp.ne.s32.totalorder %s124, %s126
      %p130 = scmp.eq.s32.totalorder %s15, 0
      %p131 = por %p129, %p130
      %p132 = scmp.ne.s32.totalorder %s124, %s126
      %p133 = scmp.eq.s32.totalorder %s20, 7
      %p134 = por %p132, %p133
      %p135 = scmp.ne.s32.totalorder %s126, %s127
      %p136 = scmp.eq.s32.totalorder %s20, 0
      %p137 = por %p135, %p136
      %p138 = scmp.ne.s32.totalorder %s126, %s127
      %p139 = scmp.eq.s32.totalorder %s21, 7
      %p140 = por %p138, %p139
      %p142 = scmp.ne.s32.totalorder %s127, %s141
      %p143 = scmp.eq.s32.totalorder %s21, 0
      %p144 = por %p142, %p143
      %s146 = sadd.s32 %s145, 1
      %p149 = scmp.eq.s32.totalorder %s15, 7
      %p150 = scmp.ne.s32.totalorder %s145, %s147
      %p151 = scmp.eq.s32.totalorder %s15, 0
      %p152 = por %p150, %p151
      %p153 = scmp.ne.s32.totalorder %s145, %s147
      %p154 = scmp.eq.s32.totalorder %s20, 7
      %p155 = por %p153, %p154
      %p156 = scmp.ne.s32.totalorder %s147, %s148
      %p157 = scmp.eq.s32.totalorder %s20, 0
      %p158 = por %p156, %p157
      %p159 = scmp.ne.s32.totalorder %s147, %s148
      %p160 = scmp.eq.s32.totalorder %s21, 7
      %p161 = por %p159, %p160
      %p163 = scmp.ne.s32.totalorder %s148, %s162
      %p164 = scmp.eq.s32.totalorder %s21, 0
      %p165 = por %p163, %p164
      %s167 = sadd.s32 %s166, 1
      %p170 = scmp.eq.s32.totalorder %s15, 7
      %p171 = scmp.ne.s32.totalorder %s166, %s168
      %p172 = scmp.eq.s32.totalorder %s15, 0
      %p173 = por %p171, %p172
      %p174 = scmp.ne.s32.totalorder %s166, %s168
      %p175 = scmp.eq.s32.totalorder %s20, 7
      %p176 = por %p174, %p175
      %p177 = scmp.ne.s32.totalorder %s168, %s169
      %p178 = scmp.eq.s32.totalorder %s20, 0
      %p179 = por %p177, %p178
      %p180 = scmp.ne.s32.totalorder %s168, %s169
      %p181 = scmp.eq.s32.totalorder %s21, 7
      %p182 = por %p180, %p181
      %p184 = scmp.ne.s32.totalorder %s169, %s183
      %p185 = scmp.eq.s32.totalorder %s21, 0
      %p186 = por %p184, %p185
      %s188 = sadd.s32 %s187, 1
      %p191 = scmp.eq.s32.totalorder %s15, 7
      %p192 = scmp.ne.s32.totalorder %s187, %s189
      %p193 = scmp.eq.s32.totalorder %s15, 0
      %p194 = por %p192, %p193
      %p195 = scmp.ne.s32.totalorder %s187, %s189
      %p196 = scmp.eq.s32.totalorder %s20, 7
      %p197 = por %p195, %p196
      %p198 = scmp.ne.s32.totalorder %s189, %s190
      %p199 = scmp.eq.s32.totalorder %s20, 0
      %p200 = por %p198, %p199
      %p201 = scmp.ne.s32.totalorder %s189, %s190
      %p202 = scmp.eq.s32.totalorder %s21, 7
      %p203 = por %p201, %p202
      %p205 = scmp.ne.s32.totalorder %s190, %s204
      %p206 = scmp.eq.s32.totalorder %s21, 0
      %p207 = por %p205, %p206
      %s208 = ssub.s32 %s22, %s41
      %s209 = ssub.s32 %s23, %s37
      %s210 = sor.u32 %s208, %s209
      %p211 = scmp.eq.s32.totalorder %s210, 0
      %s213 = sadd.s32 %s212, 1
      %s214 = scalar_select %p211, %s212, %s213
      %p217 = pneg %p211
      %p218 = scmp.eq.s32.totalorder %s15, 7
      %p219 = por %p217, %p218
      %p220 = scmp.ne.s32.totalorder %s212, %s215
      %p221 = scmp.eq.s32.totalorder %s15, 0
      %p222 = por %p220, %p221
      %p223 = scmp.ne.s32.totalorder %s212, %s215
      %p224 = scmp.eq.s32.totalorder %s20, 7
      %p225 = por %p223, %p224
      %p226 = scmp.ne.s32.totalorder %s215, %s216
      %p227 = scmp.eq.s32.totalorder %s20, 0
      %p228 = por %p226, %p227
      %p229 = scmp.ne.s32.totalorder %s215, %s216
      %p230 = scmp.eq.s32.totalorder %s21, 7
      %p231 = por %p229, %p230
      %p233 = scmp.ne.s32.totalorder %s216, %s232
      %p234 = scmp.eq.s32.totalorder %s21, 0
      %p235 = por %p233, %p234
      %s236 = ssub.s32 %s22, %s41
      %p237 = scmp.eq.s32.totalorder %s236, 0
      %s239 = sadd.s32 %s238, 1
      %s240 = scalar_select %p237, %s238, %s239
      %p243 = pneg %p237
      %p244 = scmp.eq.s32.totalorder %s15, 7
      %p245 = por %p243, %p244
      %p246 = scmp.ne.s32.totalorder %s238, %s241
      %p247 = scmp.eq.s32.totalorder %s15, 0
      %p248 = por %p246, %p247
      %p249 = scmp.ne.s32.totalorder %s238, %s241
      %p250 = scmp.eq.s32.totalorder %s20, 7
      %p251 = por %p249, %p250
      %p252 = scmp.ne.s32.totalorder %s241, %s242
      %p253 = scmp.eq.s32.totalorder %s20, 0
      %p254 = por %p252, %p253
      %p255 = scmp.ne.s32.totalorder %s241, %s242
      %p256 = scmp.eq.s32.totalorder %s21, 7
      %p257 = por %p255, %p256
      %p259 = scmp.ne.s32.totalorder %s242, %s258
      %p260 = scmp.eq.s32.totalorder %s21, 0
      %p261 = por %p259, %p260
      %p262 = scmp.le.s32.totalorder 1, %s15
      %p263 = scmp.lt.s32.totalorder %s15, 9
      %p264 = pnand %p262, %p263
      %p265 = pneg %p264
      // Predicated region
      $region9: #{encoder_forward.3} parent=5 // pred_check
        _
      $region10: #{encoder_forward.3} parent=5 // pred_check_branch
        %267 = sbr.rel (%p264) target = $region12
      $region11: #{encoder_forward.3} parent=5 // pred_region
        %s268 = ssub.s32 %s15, 1
        // Predicated region
        $region13: #{encoder_forward.3} parent=11 // pred_check
          %p269 = pneg %p137
        $region14: #{encoder_forward.3} parent=11 // pred_check_branch
          %271 = sbr.rel (%p269) target = $region16
        $region15: #{encoder_forward.3} parent=11 // pred_region
          _
        $region16: #{encoder_forward.3} parent=11 // pred_fallthru
          _
        // Predicated region
        $region17: #{encoder_forward.3} parent=11 // pred_check
          %p272 = pneg %p158
        $region18: #{encoder_forward.3} parent=11 // pred_check_branch
          %274 = sbr.rel (%p272) target = $region20
        $region19: #{encoder_forward.3} parent=11 // pred_region
          _
        $region20: #{encoder_forward.3} parent=11 // pred_fallthru
          _
        // Predicated region
        $region21: #{encoder_forward.3} parent=11 // pred_check
          %p275 = pneg %p179
        $region22: #{encoder_forward.3} parent=11 // pred_check_branch
          %277 = sbr.rel (%p275) target = $region24
        $region23: #{encoder_forward.3} parent=11 // pred_region
          _
        $region24: #{encoder_forward.3} parent=11 // pred_fallthru
          _
        // Predicated region
        $region25: #{encoder_forward.3} parent=11 // pred_check
          %p278 = pneg %p200
        $region26: #{encoder_forward.3} parent=11 // pred_check_branch
          %280 = sbr.rel (%p278) target = $region28
        $region27: #{encoder_forward.3} parent=11 // pred_region
          _
        $region28: #{encoder_forward.3} parent=11 // pred_fallthru
          _
      $region12: #{encoder_forward.3} parent=5 // pred_fallthru
        _
      %p281 = scmp.lt.s32.totalorder %s15, 8
      // Predicated region
      $region29: #{encoder_forward.3} parent=5 // pred_check
        %p282 = pneg %p281
      $region30: #{encoder_forward.3} parent=5 // pred_check_branch
        %284 = sbr.rel (%p282) target = $region32
      $region31: #{encoder_forward.3} parent=5 // pred_region
        // Predicated region
        $region33: #{encoder_forward.3} parent=31 // pred_check
          %p285 = pneg %p56
        $region34: #{encoder_forward.3} parent=31 // pred_check_branch
          %287 = sbr.rel (%p285) target = $region36
        $region35: #{encoder_forward.3} parent=31 // pred_region
          %s288 = smul.u32 16, %s24
          %p289 = scmp.lt.s32.totalorder %s22, 1
          %s290 = scalar_select %p289, %s22, 1
          %p291 = scmp.lt.s32.totalorder %s288, 31
          %s292 = scalar_select %p291, %s288, 31
          %s293 = smul.addr %s290, 32
          %s294 = sadd.s32 %s292, %s293
          %s295 = smul.addr %s294, 8
          %s296 = scalar_lea.vmem %s0, %s295
          %s297 = smul.u32 16, %s24
        $region36: #{encoder_forward.3} parent=31 // pred_fallthru
          _
        // Predicated region
        $region37: #{encoder_forward.3} parent=31 // pred_check
          %p298 = pneg %p84
        $region38: #{encoder_forward.3} parent=31 // pred_check_branch
          %300 = sbr.rel (%p298) target = $region40
        $region39: #{encoder_forward.3} parent=31 // pred_region
          %s301 = sand.u32 %s74, 1
          %s302 = sand.u32 %s74, 1
          %s303 = smul.addr %s302, 64
          %s304 = scalar_lea.vmem [#allocation3], %s303
          %s305 = smul.u32 16, %s23
          %s306 = smul.addr %s305, 2
          %s307 = sadd.s32 %s24, %s306
          %s308 = smul.addr %s307, 4
          %s309 = scalar_lea.vmem %s1, %s308
          // Predicated region
          $region41: #{encoder_forward.3} parent=39 // pred_check
            _
          $region42: #{encoder_forward.3} parent=39 // pred_check_branch
            %311 = sbr.rel (0) target = $region44
          $region43: #{encoder_forward.3} parent=39 // pred_region
            // Predicated region
            $region45: #{encoder_forward.3} parent=43 // pred_check
              _
            $region46: #{encoder_forward.3} parent=43 // pred_check_branch
              %313 = sbr.rel target = $region48
            $region47: #{encoder_forward.3} parent=43 // pred_region
              // Predicated region
              $region60: #{encoder_forward.3} parent=47 // pred_check
                _
              $region61: #{encoder_forward.3} parent=47 // pred_check_branch
                %358 = sbr.rel (0) target = $region63
              $region62: #{encoder_forward.3} parent=47 // pred_region
                loop: start=0, step=1, limit=1
                $region64: #{encoder_forward.3} parent=62 // loop_pre_header
                  _
                $region65: #{encoder_forward.3} parent=62 // loop_header
                  %s360 = sphi 0, %s364
                  %p361 = scmp.ge.s32.totalorder %s360, 1
                  %s365 = sphi %s309, %s309
                  %s366 = sphi %s304, %s304
                $region66: #{encoder_forward.3} parent=62 // loop_header_branch
                  %363 = sbr.rel (%p361) target = $region70
                $region67: #{encoder_forward.3} parent=62 // loop_body
                  _
                $region68: #{encoder_forward.3} parent=62 // loop_footer
                  %s364 = sadd.s32 1, %s360
                $region69: #{encoder_forward.3} parent=62 // loop_footer_branch
                  %359 = sbr.rel target = $region65
                $region70: #{encoder_forward.3} parent=62 // loop_exit
                  _
                loop: start=0, step=1, limit=1
                $region71: #{encoder_forward.3} parent=62 // loop_pre_header
                  _
                $region72: #{encoder_forward.3} parent=62 // loop_header
                  %s369 = sphi 0, %s373
                  %p370 = scmp.ge.s32.totalorder %s369, 1
                  %s374 = sphi %s309, %s309
                  %s375 = sphi %s304, %s304
                $region73: #{encoder_forward.3} parent=62 // loop_header_branch
                  %372 = sbr.rel (%p370) target = $region77
                $region74: #{encoder_forward.3} parent=62 // loop_body
                  %v376 = vld [vmem:[%s374] sm:$0xf]
                  %377 = vst [vmem:[%s375] sm:$0xf] %v376
                  %v378 = vld [vmem:[%s374 + $0x8] sm:$0xf]
                  %379 = vst [vmem:[%s375 + $0x4] sm:$0xf] %v378
                  %v380 = vld [vmem:[%s374 + $0x10] sm:$0xf]
                  %381 = vst [vmem:[%s375 + $0x8] sm:$0xf] %v380
                  %v382 = vld [vmem:[%s374 + $0x18] sm:$0xf]
                  %383 = vst [vmem:[%s375 + $0xc] sm:$0xf] %v382
                  %v384 = vld [vmem:[%s374 + $0x20] sm:$0xf]
                  %385 = vst [vmem:[%s375 + $0x10] sm:$0xf] %v384
                  %v386 = vld [vmem:[%s374 + $0x28] sm:$0xf]
                  %387 = vst [vmem:[%s375 + $0x14] sm:$0xf] %v386
                  %v388 = vld [vmem:[%s374 + $0x30] sm:$0xf]
                  %389 = vst [vmem:[%s375 + $0x18] sm:$0xf] %v388
                  %v390 = vld [vmem:[%s374 + $0x38] sm:$0xf]
                  %391 = vst [vmem:[%s375 + $0x1c] sm:$0xf] %v390
                  %v392 = vld [vmem:[%s374 + $0x40] sm:$0xf]
                  %393 = vst [vmem:[%s375 + $0x20] sm:$0xf] %v392
                  %v394 = vld [vmem:[%s374 + $0x48] sm:$0xf]
                  %395 = vst [vmem:[%s375 + $0x24] sm:$0xf] %v394
                  %v396 = vld [vmem:[%s374 + $0x50] sm:$0xf]
                  %397 = vst [vmem:[%s375 + $0x28] sm:$0xf] %v396
                  %v398 = vld [vmem:[%s374 + $0x58] sm:$0xf]
                  %399 = vst [vmem:[%s375 + $0x2c] sm:$0xf] %v398
                  %v400 = vld [vmem:[%s374 + $0x60] sm:$0xf]
                  %401 = vst [vmem:[%s375 + $0x30] sm:$0xf] %v400
                  %v402 = vld [vmem:[%s374 + $0x68] sm:$0xf]
                  %403 = vst [vmem:[%s375 + $0x34] sm:$0xf] %v402
                  %v404 = vld [vmem:[%s374 + $0x70] sm:$0xf]
                  %405 = vst [vmem:[%s375 + $0x38] sm:$0xf] %v404
                  %v406 = vld [vmem:[%s374 + $0x78] sm:$0xf]
                  %407 = vst [vmem:[%s375 + $0x3c] sm:$0xf] %v406
                $region75: #{encoder_forward.3} parent=62 // loop_footer
                  %s373 = sadd.s32 1, %s369
                $region76: #{encoder_forward.3} parent=62 // loop_footer_branch
                  %368 = sbr.rel target = $region72
                $region77: #{encoder_forward.3} parent=62 // loop_exit
                  _
              $region63: #{encoder_forward.3} parent=47 // pred_fallthru
                _
            $region48: #{encoder_forward.3} parent=43 // pred_fallthru
              _
            // Predicated region
            $region49: #{encoder_forward.3} parent=43 // pred_check
              _
            $region50: #{encoder_forward.3} parent=43 // pred_check_branch
              %315 = sbr.rel (0) target = $region52
            $region51: #{encoder_forward.3} parent=43 // pred_region
              loop: start=0, step=1, limit=1
              $region53: #{encoder_forward.3} parent=51 // loop_pre_header
                _
              $region54: #{encoder_forward.3} parent=51 // loop_header
                %s318 = sphi 0, %s322
                %p319 = scmp.ge.s32.totalorder %s318, 1
                %s323 = sphi %s309, %s309
                %s324 = sphi %s304, %s304
              $region55: #{encoder_forward.3} parent=51 // loop_header_branch
                %321 = sbr.rel (%p319) target = $region59
              $region56: #{encoder_forward.3} parent=51 // loop_body
                %v325 = vld [vmem:[%s323] sm:$0xf]
                %326 = vst [vmem:[%s324] sm:$0xf] %v325
                %v327 = vld [vmem:[%s323 + $0x8] sm:$0xf]
                %328 = vst [vmem:[%s324 + $0x4] sm:$0xf] %v327
                %v329 = vld [vmem:[%s323 + $0x10] sm:$0xf]
                %330 = vst [vmem:[%s324 + $0x8] sm:$0xf] %v329
                %v331 = vld [vmem:[%s323 + $0x18] sm:$0xf]
                %332 = vst [vmem:[%s324 + $0xc] sm:$0xf] %v331
                %v333 = vld [vmem:[%s323 + $0x20] sm:$0xf]
                %334 = vst [vmem:[%s324 + $0x10] sm:$0xf] %v333
                %v335 = vld [vmem:[%s323 + $0x28] sm:$0xf]
                %336 = vst [vmem:[%s324 + $0x14] sm:$0xf] %v335
                %v337 = vld [vmem:[%s323 + $0x30] sm:$0xf]
                %338 = vst [vmem:[%s324 + $0x18] sm:$0xf] %v337
                %v339 = vld [vmem:[%s323 + $0x38] sm:$0xf]
                %340 = vst [vmem:[%s324 + $0x1c] sm:$0xf] %v339
                %v341 = vld [vmem:[%s323 + $0x40] sm:$0xf]
                %342 = vst [vmem:[%s324 + $0x20] sm:$0xf] %v341
                %v343 = vld [vmem:[%s323 + $0x48] sm:$0xf]
                %344 = vst [vmem:[%s324 + $0x24] sm:$0xf] %v343
                %v345 = vld [vmem:[%s323 + $0x50] sm:$0xf]
                %346 = vst [vmem:[%s324 + $0x28] sm:$0xf] %v345
                %v347 = vld [vmem:[%s323 + $0x58] sm:$0xf]
                %348 = vst [vmem:[%s324 + $0x2c] sm:$0xf] %v347
                %v349 = vld [vmem:[%s323 + $0x60] sm:$0xf]
                %350 = vst [vmem:[%s324 + $0x30] sm:$0xf] %v349
                %v351 = vld [vmem:[%s323 + $0x68] sm:$0xf]
                %352 = vst [vmem:[%s324 + $0x34] sm:$0xf] %v351
                %v353 = vld [vmem:[%s323 + $0x70] sm:$0xf]
                %354 = vst [vmem:[%s324 + $0x38] sm:$0xf] %v353
                %v355 = vld [vmem:[%s323 + $0x78] sm:$0xf]
                %356 = vst [vmem:[%s324 + $0x3c] sm:$0xf] %v355
              $region57: #{encoder_forward.3} parent=51 // loop_footer
                %s322 = sadd.s32 1, %s318
              $region58: #{encoder_forward.3} parent=51 // loop_footer_branch
                %317 = sbr.rel target = $region54
              $region59: #{encoder_forward.3} parent=51 // loop_exit
                _
            $region52: #{encoder_forward.3} parent=43 // pred_fallthru
              _
          $region44: #{encoder_forward.3} parent=39 // pred_fallthru
            _
          %408 = vnop
        $region40: #{encoder_forward.3} parent=31 // pred_fallthru
          _
        // Predicated region
        $region78: #{encoder_forward.3} parent=31 // pred_check
          %p409 = pneg %p110
        $region79: #{encoder_forward.3} parent=31 // pred_check_branch
          %411 = sbr.rel (%p409) target = $region81
        $region80: #{encoder_forward.3} parent=31 // pred_region
          %p412 = scmp.lt.s32.totalorder %s23, 1
          %s413 = scalar_select %p412, %s23, 1
          %s414 = smul.addr %s413, 4
          %s415 = scalar_lea.vmem %s2, %s414
        $region81: #{encoder_forward.3} parent=31 // pred_fallthru
          _
      $region32: #{encoder_forward.3} parent=5 // pred_fallthru
        _
      %p416 = scmp.le.s32.totalorder 1, %s15
      %p417 = scmp.lt.s32.totalorder %s15, 9
      %p418 = pnand %p416, %p417
      %p419 = pneg %p418
      // Predicated region
      $region82: #{encoder_forward.3} parent=5 // pred_check
        _
      $region83: #{encoder_forward.3} parent=5 // pred_check_branch
        %421 = sbr.rel (%p418) target = $region85
      $region84: #{encoder_forward.3} parent=5 // pred_region
        %s422 = ssub.s32 %s15, 1
        %s423 = sand.u32 %s77, 1
        %s424 = sand.u32 %s77, 1
        %s425 = smul.addr %s424, 64
        %s426 = scalar_lea.vmem [#allocation3], %s425
        // Predicated region
        $region86: #{encoder_forward.3} parent=84 // pred_check
          %p427 = pneg %p90
        $region87: #{encoder_forward.3} parent=84 // pred_check_branch
          %429 = sbr.rel (%p427) target = $region89
        $region88: #{encoder_forward.3} parent=84 // pred_region
          _
        $region89: #{encoder_forward.3} parent=84 // pred_fallthru
          _
        %s430 = smul.u32 16, %s27
        %p431 = scmp.lt.s32.totalorder %s25, 1
        %s432 = scalar_select %p431, %s25, 1
        %p433 = scmp.lt.s32.totalorder %s430, 31
        %s434 = scalar_select %p433, %s430, 31
        %s435 = smul.addr %s432, 32
        %s436 = sadd.s32 %s434, %s435
        %s437 = smul.addr %s436, 8
        %s438 = scalar_lea.vmem %s0, %s437
        %p439 = pneg %p62
        %p440 = pneg %p59
        %s441 = sand.u32 %s77, 1
        %s442 = sand.u32 %s77, 1
        %s443 = smul.addr %s442, 64
        %s444 = scalar_lea.vmem [#allocation3], %s443
        %p445 = pneg %p90
        %p446 = pneg %p87
        %p447 = scmp.lt.s32.totalorder %s26, 1
        %s448 = scalar_select %p447, %s26, 1
        %s449 = smul.addr %s448, 4
        %s450 = scalar_lea.vmem %s2, %s449
        %p451 = pneg %p116
        %p452 = pneg %p113
        %p453 = pneg %p137
        %p454 = pneg %p134
        %p455 = pneg %p158
        %p456 = pneg %p155
        %p457 = pneg %p179
        %p458 = pneg %p176
        %p459 = pneg %p200
        %p460 = pneg %p197
        %p461 = pneg %p228
        %p462 = pneg %p225
        %s463 = smul.u32 16, %s26
        %p464 = scmp.lt.s32.totalorder %s25, 1
        %s465 = scalar_select %p464, %s25, 1
        %p466 = scmp.lt.s32.totalorder %s463, 31
        %s467 = scalar_select %p466, %s463, 31
        %s468 = smul.addr %s465, 32
        %s469 = sadd.s32 %s467, %s468
        %s470 = smul.addr %s469, 8
        %s471 = scalar_lea.vmem %s7, %s470
        %p472 = pneg %p254
        %p473 = pneg %p251
        %p474 = scmp.lt.s32.totalorder %s25, 1
        %s475 = scalar_select %p474, %s25, 1
        %s476 = smul.addr %s475, 8
        %s477 = scalar_lea.vmem %s8, %s476
        %s478 = smul.u32 16, %s27
        %p479 = scmp.lt.s32.totalorder %s25, 1
        %s480 = scalar_select %p479, %s25, 1
        %p481 = scmp.lt.s32.totalorder %s478, 31
        %s482 = scalar_select %p481, %s478, 31
        %s483 = smul.addr %s480, 32
        %s484 = sadd.s32 %s482, %s483
        %s485 = smul.addr %s484, 8
        %s486 = scalar_lea.vmem %s0, %s485
        %s487 = smul.u32 16, %s27
        %s488 = smul.u32 16, %s26
        %p489 = scmp.lt.s32.totalorder %s26, 1
        %s490 = scalar_select %p489, %s26, 1
        %s491 = smul.addr %s490, 4
        %s492 = scalar_lea.vmem %s2, %s491
        %s493 = smul.u32 16, %s26
        %p494 = scmp.lt.s32.totalorder %s25, 1
        %s495 = scalar_select %p494, %s25, 1
        %p496 = scmp.lt.s32.totalorder %s493, 31
        %s497 = scalar_select %p496, %s493, 31
        %s498 = smul.addr %s495, 32
        %s499 = sadd.s32 %s497, %s498
        %s500 = smul.addr %s499, 8
        %s501 = scalar_lea.vmem %s7, %s500
        %s502 = smul.u32 16, %s26
        %p503 = scmp.lt.s32.totalorder %s25, 1
        %s504 = scalar_select %p503, %s25, 1
        %s505 = smul.addr %s504, 8
        %s506 = scalar_lea.vmem %s8, %s505
        %p507 = scmp.eq.s32.totalorder %s27, 0
        // Predicated region
        $region90: #{encoder_forward.3} parent=84 // pred_check
          %p508 = pneg %p507
        $region91: #{encoder_forward.3} parent=84 // pred_check_branch
          %510 = sbr.rel (%p508) target = $region93
        $region92: #{encoder_forward.3} parent=84 // pred_region
          %511 = vst [vmem:[#allocation2] sm:$0xff] 0.0
          %512 = vst [vmem:[#allocation2 + $0x8] sm:$0xff] 0.0
          %513 = vst [vmem:[#allocation2 + $0x10] sm:$0xff] 0.0
          %514 = vst [vmem:[#allocation2 + $0x18] sm:$0xff] 0.0
          %515 = vst [vmem:[#allocation2 + $0x20] sm:$0xff] 0.0
          %516 = vst [vmem:[#allocation2 + $0x28] sm:$0xff] 0.0
          %517 = vst [vmem:[#allocation2 + $0x30] sm:$0xff] 0.0
          %518 = vst [vmem:[#allocation2 + $0x38] sm:$0xff] 0.0
          %519 = vst [vmem:[#allocation2 + $0x40] sm:$0xff] 0.0
          %520 = vst [vmem:[#allocation2 + $0x48] sm:$0xff] 0.0
          %521 = vst [vmem:[#allocation2 + $0x50] sm:$0xff] 0.0
          %522 = vst [vmem:[#allocation2 + $0x58] sm:$0xff] 0.0
          %523 = vst [vmem:[#allocation2 + $0x60] sm:$0xff] 0.0
          %524 = vst [vmem:[#allocation2 + $0x68] sm:$0xff] 0.0
          %525 = vst [vmem:[#allocation2 + $0x70] sm:$0xff] 0.0
          %526 = vst [vmem:[#allocation2 + $0x78] sm:$0xff] 0.0
        $region93: #{encoder_forward.3} parent=84 // pred_fallthru
          _
        %p527 = scmp.eq.s32.totalorder %s26, 0
        %p528 = pnand %p527, %p507
        %p529 = pneg %p528
        // Predicated region
        $region94: #{encoder_forward.3} parent=84 // pred_check
          _
        $region95: #{encoder_forward.3} parent=84 // pred_check_branch
          %531 = sbr.rel (%p528) target = $region97
        $region96: #{encoder_forward.3} parent=84 // pred_region
          %532 = vst [vmem:[%s506] sm:$0xff] 0.0
        $region97: #{encoder_forward.3} parent=84 // pred_fallthru
          _
        %v533 = vld [vmem:[%s426] sm:$0xf]
        %v534 = vld [vmem:[%s426 + $0x4] sm:$0xf]
        %v535 = vld [vmem:[%s426 + $0x8] sm:$0xf]
        %v536 = vld [vmem:[%s426 + $0xc] sm:$0xf]
        %v537 = vld [vmem:[%s426 + $0x10] sm:$0xf]
        %v538 = vld [vmem:[%s426 + $0x14] sm:$0xf]
        %v539 = vld [vmem:[%s426 + $0x18] sm:$0xf]
        %v540 = vld [vmem:[%s426 + $0x1c] sm:$0xf]
        %v541 = vld [vmem:[%s426 + $0x20] sm:$0xf]
        %v542 = vld [vmem:[%s426 + $0x24] sm:$0xf]
        %v543 = vld [vmem:[%s426 + $0x28] sm:$0xf]
        %v544 = vld [vmem:[%s426 + $0x2c] sm:$0xf]
        %v545 = vld [vmem:[%s426 + $0x30] sm:$0xf]
        %v546 = vld [vmem:[%s426 + $0x34] sm:$0xf]
        %v547 = vld [vmem:[%s426 + $0x38] sm:$0xf]
        %v548 = vld [vmem:[%s426 + $0x3c] sm:$0xf]
        %v549 = vunpack.c.l.bf16 %v533
        %v550 = vunpack.c.l.bf16 %v534
        %v551 = vunpack.c.l.bf16 %v535
        %v552 = vunpack.c.l.bf16 %v536
        %v553 = vunpack.c.l.bf16 %v537
        %v554 = vunpack.c.l.bf16 %v538
        %v555 = vunpack.c.l.bf16 %v539
        %v556 = vunpack.c.l.bf16 %v540
        %v557 = vunpack.c.l.bf16 %v541
        %v558 = vunpack.c.l.bf16 %v542
        %v559 = vunpack.c.l.bf16 %v543
        %v560 = vunpack.c.l.bf16 %v544
        %v561 = vunpack.c.l.bf16 %v545
        %v562 = vunpack.c.l.bf16 %v546
        %v563 = vunpack.c.l.bf16 %v547
        %v564 = vunpack.c.l.bf16 %v548
        %v565 = vld [vmem:[#allocation2] sm:$0xff]
        %v566 = vld [vmem:[#allocation2 + $0x8] sm:$0xff]
        %v567 = vld [vmem:[#allocation2 + $0x10] sm:$0xff]
        %v568 = vld [vmem:[#allocation2 + $0x18] sm:$0xff]
        %v569 = vld [vmem:[#allocation2 + $0x20] sm:$0xff]
        %v570 = vld [vmem:[#allocation2 + $0x28] sm:$0xff]
        %v571 = vld [vmem:[#allocation2 + $0x30] sm:$0xff]
        %v572 = vld [vmem:[#allocation2 + $0x38] sm:$0xff]
        %v573 = vld [vmem:[#allocation2 + $0x40] sm:$0xff]
        %v574 = vld [vmem:[#allocation2 + $0x48] sm:$0xff]
        %v575 = vld [vmem:[#allocation2 + $0x50] sm:$0xff]
        %v576 = vld [vmem:[#allocation2 + $0x58] sm:$0xff]
        %v577 = vld [vmem:[#allocation2 + $0x60] sm:$0xff]
        %v578 = vld [vmem:[#allocation2 + $0x68] sm:$0xff]
        %v579 = vld [vmem:[#allocation2 + $0x70] sm:$0xff]
        %v580 = vld [vmem:[#allocation2 + $0x78] sm:$0xff]
        %v581 = vld [vmem:[%s486] sm:$0xff]
        %v582 = vld [vmem:[%s486 + $0x8] sm:$0xff]
        %v583 = vld [vmem:[%s486 + $0x10] sm:$0xff]
        %v584 = vld [vmem:[%s486 + $0x18] sm:$0xff]
        %v585 = vld [vmem:[%s486 + $0x20] sm:$0xff]
        %v586 = vld [vmem:[%s486 + $0x28] sm:$0xff]
        %v587 = vld [vmem:[%s486 + $0x30] sm:$0xff]
        %v588 = vld [vmem:[%s486 + $0x38] sm:$0xff]
        %v589 = vld [vmem:[%s486 + $0x40] sm:$0xff]
        %v590 = vld [vmem:[%s486 + $0x48] sm:$0xff]
        %v591 = vld [vmem:[%s486 + $0x50] sm:$0xff]
        %v592 = vld [vmem:[%s486 + $0x58] sm:$0xff]
        %v593 = vld [vmem:[%s486 + $0x60] sm:$0xff]
        %v594 = vld [vmem:[%s486 + $0x68] sm:$0xff]
        %v595 = vld [vmem:[%s486 + $0x70] sm:$0xff]
        %v596 = vld [vmem:[%s486 + $0x78] sm:$0xff]
        %597 = vmatprep.subr.mxu0 0.0
        %598 = vmatpush1.msra.mxu0 %v581
        %599 = vmatprep.subr.mxu0 0.0
        %600 = vmatpush1.msra.mxu0 %v582
        %601 = vmatprep.subr.mxu0 0.0
        %602 = vmatpush1.msra.mxu0 %v583
        %603 = vmatprep.subr.mxu0 0.0
        %604 = vmatpush1.msra.mxu0 %v584
        %605 = vmatprep.subr.mxu0 0.0
        %606 = vmatpush1.msra.mxu0 %v585
        %607 = vmatprep.subr.mxu0 0.0
        %608 = vmatpush1.msra.mxu0 %v586
        %609 = vmatprep.subr.mxu0 0.0
        %610 = vmatpush1.msra.mxu0 %v587
        %611 = vmatprep.subr.mxu0 0.0
        %612 = vmatpush1.msra.mxu0 %v588
        %613 = vmatprep.subr.mxu0 0.0
        %614 = vmatpush1.msra.mxu0 %v589
        %615 = vmatprep.subr.mxu0 0.0
        %616 = vmatpush1.msra.mxu0 %v590
        %617 = vmatprep.subr.mxu0 0.0
        %618 = vmatpush1.msra.mxu0 %v591
        %619 = vmatprep.subr.mxu0 0.0
        %620 = vmatpush1.msra.mxu0 %v592
        %621 = vmatprep.subr.mxu0 0.0
        %622 = vmatpush1.msra.mxu0 %v593
        %623 = vmatprep.subr.mxu0 0.0
        %624 = vmatpush1.msra.mxu0 %v594
        %625 = vmatprep.subr.mxu0 0.0
        %626 = vmatpush1.msra.mxu0 %v595
        %627 = vmatprep.subr.mxu0 0.0
        %628 = vmatpush1.msra.mxu0 %v596
        %629 = vmatprep.subr.mxu0 0.0
        %630 = vmatpush1.msra.mxu0 0.0
        %631 = vmatprep.subr.mxu0 0.0
        %632 = vmatpush1.msra.mxu0 0.0
        %633 = vmatprep.subr.mxu0 0.0
        %634 = vmatpush1.msra.mxu0 0.0
        %635 = vmatprep.subr.mxu0 0.0
        %636 = vmatpush1.msra.mxu0 0.0
        %637 = vmatprep.subr.mxu0 0.0
        %638 = vmatpush1.msra.mxu0 0.0
        %639 = vmatprep.subr.mxu0 0.0
        %640 = vmatpush1.msra.mxu0 0.0
        %641 = vmatprep.subr.mxu0 0.0
        %642 = vmatpush1.msra.mxu0 0.0
        %643 = vmatprep.subr.mxu0 0.0
        %644 = vmatpush1.msra.mxu0 0.0
        %645 = vmatprep.subr.mxu0 0.0
        %646 = vmatpush1.msra.mxu0 0.0
        %647 = vmatprep.subr.mxu0 0.0
        %648 = vmatpush1.msra.mxu0 0.0
        %649 = vmatprep.subr.mxu0 0.0
        %650 = vmatpush1.msra.mxu0 0.0
        %651 = vmatprep.subr.mxu0 0.0
        %652 = vmatpush1.msra.mxu0 0.0
        %653 = vmatprep.subr.mxu0 0.0
        %654 = vmatpush1.msra.mxu0 0.0
        %655 = vmatprep.subr.mxu0 0.0
        %656 = vmatpush1.msra.mxu0 0.0
        %657 = vmatprep.subr.mxu0 0.0
        %658 = vmatpush1.msra.mxu0 0.0
        %659 = vmatprep.subr.mxu0 0.0
        %660 = vmatpush1.msra.mxu0 0.0
        %661 = vmatprep.mubr.f32.mxu0 0.0
        %662 = vmatmul.mubr.f32.gmra.mrb[0].mxu0 %v549
        %v663 = vpop.f32.mrb[0].mxu0
        %v664 = vadd.f32 0.0, %v663
        %v665 = vpop.f32.mrb[0].mxu0
        %666 = vmatprep.mubr.f32.mxu0 0.0
        %667 = vmatmul.mubr.f32.gmra.mrb[0].mxu0 %v550
        %v668 = vpop.f32.mrb[0].mxu0
        %v669 = vadd.f32 0.0, %v668
        %v670 = vpop.f32.mrb[0].mxu0
        %671 = vmatprep.mubr.f32.mxu0 0.0
        %672 = vmatmul.mubr.f32.gmra.mrb[0].mxu0 %v551
        %v673 = vpop.f32.mrb[0].mxu0
        %v674 = vadd.f32 0.0, %v673
        %v675 = vpop.f32.mrb[0].mxu0
        %676 = vmatprep.mubr.f32.mxu0 0.0
        %677 = vmatmul.mubr.f32.gmra.mrb[0].mxu0 %v552
        %v678 = vpop.f32.mrb[0].mxu0
        %v679 = vadd.f32 0.0, %v678
        %v680 = vpop.f32.mrb[0].mxu0
        %681 = vmatprep.mubr.f32.mxu0 0.0
        %682 = vmatmul.mubr.f32.gmra.mrb[0].mxu0 %v553
        %v683 = vpop.f32.mrb[0].mxu0
        %v684 = vadd.f32 0.0, %v683
        %v685 = vpop.f32.mrb[0].mxu0
        %686 = vmatprep.mubr.f32.mxu0 0.0
        %687 = vmatmul.mubr.f32.gmra.mrb[0].mxu0 %v554
        %v688 = vpop.f32.mrb[0].mxu0
        %v689 = vadd.f32 0.0, %v688
        %v690 = vpop.f32.mrb[0].mxu0
        %691 = vmatprep.mubr.f32.mxu0 0.0
        %692 = vmatmul.mubr.f32.gmra.mrb[0].mxu0 %v555
        %v693 = vpop.f32.mrb[0].mxu0
        %v694 = vadd.f32 0.0, %v693
        %v695 = vpop.f32.mrb[0].mxu0
        %696 = vmatprep.mubr.f32.mxu0 0.0
        %697 = vmatmul.mubr.f32.gmra.mrb[0].mxu0 %v556
        %v698 = vpop.f32.mrb[0].mxu0
        %v699 = vadd.f32 0.0, %v698
        %v700 = vpop.f32.mrb[0].mxu0
        %701 = vmatprep.mubr.f32.mxu0 0.0
        %702 = vmatmul.mubr.f32.gmra.mrb[0].mxu0 %v557
        %v703 = vpop.f32.mrb[0].mxu0
        %v704 = vadd.f32 0.0, %v703
        %v705 = vpop.f32.mrb[0].mxu0
        %706 = vmatprep.mubr.f32.mxu0 0.0
        %707 = vmatmul.mubr.f32.gmra.mrb[0].mxu0 %v558
        %v708 = vpop.f32.mrb[0].mxu0
        %v709 = vadd.f32 0.0, %v708
        %v710 = vpop.f32.mrb[0].mxu0
        %711 = vmatprep.mubr.f32.mxu0 0.0
        %712 = vmatmul.mubr.f32.gmra.mrb[0].mxu0 %v559
        %v713 = vpop.f32.mrb[0].mxu0
        %v714 = vadd.f32 0.0, %v713
        %v715 = vpop.f32.mrb[0].mxu0
        %716 = vmatprep.mubr.f32.mxu0 0.0
        %717 = vmatmul.mubr.f32.gmra.mrb[0].mxu0 %v560
        %v718 = vpop.f32.mrb[0].mxu0
        %v719 = vadd.f32 0.0, %v718
        %v720 = vpop.f32.mrb[0].mxu0
        %721 = vmatprep.mubr.f32.mxu0 0.0
        %722 = vmatmul.mubr.f32.gmra.mrb[0].mxu0 %v561
        %v723 = vpop.f32.mrb[0].mxu0
        %v724 = vadd.f32 0.0, %v723
        %v725 = vpop.f32.mrb[0].mxu0
        %726 = vmatprep.mubr.f32.mxu0 0.0
        %727 = vmatmul.mubr.f32.gmra.mrb[0].mxu0 %v562
        %v728 = vpop.f32.mrb[0].mxu0
        %v729 = vadd.f32 0.0, %v728
        %v730 = vpop.f32.mrb[0].mxu0
        %731 = vmatprep.mubr.f32.mxu0 0.0
        %732 = vmatmul.mubr.f32.gmra.mrb[0].mxu0 %v563
        %v733 = vpop.f32.mrb[0].mxu0
        %v734 = vadd.f32 0.0, %v733
        %v735 = vpop.f32.mrb[0].mxu0
        %736 = vmatprep.mubr.f32.mxu0 0.0
        %737 = vmatmul.mubr.f32.gmra.mrb[0].mxu0 %v564
        %v738 = vpop.f32.mrb[0].mxu0
        %v739 = vadd.f32 0.0, %v738
        %v740 = vpop.f32.mrb[0].mxu0
        %741 = vdwg.mxu0
        %v742 = vadd.f32 %v565, %v664
        %v743 = vadd.f32 %v566, %v669
        %v744 = vadd.f32 %v567, %v674
        %v745 = vadd.f32 %v568, %v679
        %v746 = vadd.f32 %v569, %v684
        %v747 = vadd.f32 %v570, %v689
        %v748 = vadd.f32 %v571, %v694
        %v749 = vadd.f32 %v572, %v699
        %v750 = vadd.f32 %v573, %v704
        %v751 = vadd.f32 %v574, %v709
        %v752 = vadd.f32 %v575, %v714
        %v753 = vadd.f32 %v576, %v719
        %v754 = vadd.f32 %v577, %v724
        %v755 = vadd.f32 %v578, %v729
        %v756 = vadd.f32 %v579, %v734
        %v757 = vadd.f32 %v580, %v739
        %758 = vst [vmem:[#allocation2] sm:$0xff] %v742
        %759 = vst [vmem:[#allocation2 + $0x8] sm:$0xff] %v743
        %760 = vst [vmem:[#allocation2 + $0x10] sm:$0xff] %v744
        %761 = vst [vmem:[#allocation2 + $0x18] sm:$0xff] %v745
        %762 = vst [vmem:[#allocation2 + $0x20] sm:$0xff] %v746
        %763 = vst [vmem:[#allocation2 + $0x28] sm:$0xff] %v747
        %764 = vst [vmem:[#allocation2 + $0x30] sm:$0xff] %v748
        %765 = vst [vmem:[#allocation2 + $0x38] sm:$0xff] %v749
        %766 = vst [vmem:[#allocation2 + $0x40] sm:$0xff] %v750
        %767 = vst [vmem:[#allocation2 + $0x48] sm:$0xff] %v751
        %768 = vst [vmem:[#allocation2 + $0x50] sm:$0xff] %v752
        %769 = vst [vmem:[#allocation2 + $0x58] sm:$0xff] %v753
        %770 = vst [vmem:[#allocation2 + $0x60] sm:$0xff] %v754
        %771 = vst [vmem:[#allocation2 + $0x68] sm:$0xff] %v755
        %772 = vst [vmem:[#allocation2 + $0x70] sm:$0xff] %v756
        %773 = vst [vmem:[#allocation2 + $0x78] sm:$0xff] %v757
        %p774 = scmp.eq.s32.totalorder %s27, 1
        // Predicated region
        $region98: #{encoder_forward.3} parent=84 // pred_check
          %p775 = pneg %p774
        $region99: #{encoder_forward.3} parent=84 // pred_check_branch
          %777 = sbr.rel (%p775) target = $region101
        $region100: #{encoder_forward.3} parent=84 // pred_region
          %v778 = vld [vmem:[#allocation2] sm:$0xff]
          %v779 = vld [vmem:[#allocation2 + $0x8] sm:$0xff]
          %v780 = vld [vmem:[#allocation2 + $0x10] sm:$0xff]
          %v781 = vld [vmem:[#allocation2 + $0x18] sm:$0xff]
          %v782 = vld [vmem:[#allocation2 + $0x20] sm:$0xff]
          %v783 = vld [vmem:[#allocation2 + $0x28] sm:$0xff]
          %v784 = vld [vmem:[#allocation2 + $0x30] sm:$0xff]
          %v785 = vld [vmem:[#allocation2 + $0x38] sm:$0xff]
          %v786 = vld [vmem:[#allocation2 + $0x40] sm:$0xff]
          %v787 = vld [vmem:[#allocation2 + $0x48] sm:$0xff]
          %v788 = vld [vmem:[#allocation2 + $0x50] sm:$0xff]
          %v789 = vld [vmem:[#allocation2 + $0x58] sm:$0xff]
          %v790 = vld [vmem:[#allocation2 + $0x60] sm:$0xff]
          %v791 = vld [vmem:[#allocation2 + $0x68] sm:$0xff]
          %v792 = vld [vmem:[#allocation2 + $0x70] sm:$0xff]
          %v793 = vld [vmem:[#allocation2 + $0x78] sm:$0xff]
          %v794 = vld [vmem:[%s3] sm:$0xff]
          %v795 = vld [vmem:[%s3 + $0x8] sm:$0xff]
          %v796 = vld [vmem:[%s3 + $0x10] sm:$0xff]
          %v797 = vld [vmem:[%s3 + $0x18] sm:$0xff]
          %v798 = vld [vmem:[%s3 + $0x20] sm:$0xff]
          %v799 = vld [vmem:[%s3 + $0x28] sm:$0xff]
          %v800 = vld [vmem:[%s3 + $0x30] sm:$0xff]
          %v801 = vld [vmem:[%s3 + $0x38] sm:$0xff]
          %v802 = vld [vmem:[%s3 + $0x40] sm:$0xff]
          %v803 = vld [vmem:[%s3 + $0x48] sm:$0xff]
          %v804 = vld [vmem:[%s3 + $0x50] sm:$0xff]
          %v805 = vld [vmem:[%s3 + $0x58] sm:$0xff]
          %v806 = vld [vmem:[%s3 + $0x60] sm:$0xff]
          %v807 = vld [vmem:[%s3 + $0x68] sm:$0xff]
          %v808 = vld [vmem:[%s3 + $0x70] sm:$0xff]
          %v809 = vld [vmem:[%s3 + $0x78] sm:$0xff]
          %v810 = vld [vmem:[%s4] sm:$0x1]
          %v812 = vlaneseq
          %v813 = vshrl.u32 %v812, 7
          %v814 = vsub.s32 0, %v813
          %v815 = vrot.slane %v810, %v814
          %817 = vmatprep.subr.mxu0 0.0
          %818 = vmatpush1.msra.mxu0 %v794
          %819 = vmatprep.subr.mxu0 0.0
          %820 = vmatpush1.msra.mxu0 %v795
          %821 = vmatprep.subr.mxu0 0.0
          %822 = vmatpush1.msra.mxu0 %v796
          %823 = vmatprep.subr.mxu0 0.0
          %824 = vmatpush1.msra.mxu0 %v797
          %825 = vmatprep.subr.mxu0 0.0
          %826 = vmatpush1.msra.mxu0 %v798
          %827 = vmatprep.subr.mxu0 0.0
          %828 = vmatpush1.msra.mxu0 %v799
          %829 = vmatprep.subr.mxu0 0.0
          %830 = vmatpush1.msra.mxu0 %v800
          %831 = vmatprep.subr.mxu0 0.0
          %832 = vmatpush1.msra.mxu0 %v801
          %833 = vmatprep.subr.mxu0 0.0
          %834 = vmatpush1.msra.mxu0 %v802
          %835 = vmatprep.subr.mxu0 0.0
          %836 = vmatpush1.msra.mxu0 %v803
          %837 = vmatprep.subr.mxu0 0.0
          %838 = vmatpush1.msra.mxu0 %v804
          %839 = vmatprep.subr.mxu0 0.0
          %840 = vmatpush1.msra.mxu0 %v805
          %841 = vmatprep.subr.mxu0 0.0
          %842 = vmatpush1.msra.mxu0 %v806
          %843 = vmatprep.subr.mxu0 0.0
          %844 = vmatpush1.msra.mxu0 %v807
          %845 = vmatprep.subr.mxu0 0.0
          %846 = vmatpush1.msra.mxu0 %v808
          %847 = vmatprep.subr.mxu0 0.0
          %848 = vmatpush1.msra.mxu0 %v809
          %849 = vmatprep.subr.mxu0 0.0
          %850 = vmatpush1.msra.mxu0 0.0
          %851 = vmatprep.subr.mxu0 0.0
          %852 = vmatpush1.msra.mxu0 0.0
          %853 = vmatprep.subr.mxu0 0.0
          %854 = vmatpush1.msra.mxu0 0.0
          %855 = vmatprep.subr.mxu0 0.0
          %856 = vmatpush1.msra.mxu0 0.0
          %857 = vmatprep.subr.mxu0 0.0
          %858 = vmatpush1.msra.mxu0 0.0
          %859 = vmatprep.subr.mxu0 0.0
          %860 = vmatpush1.msra.mxu0 0.0
          %861 = vmatprep.subr.mxu0 0.0
          %862 = vmatpush1.msra.mxu0 0.0
          %863 = vmatprep.subr.mxu0 0.0
          %864 = vmatpush1.msra.mxu0 0.0
          %865 = vmatprep.subr.mxu0 0.0
          %866 = vmatpush1.msra.mxu0 0.0
          %867 = vmatprep.subr.mxu0 0.0
          %868 = vmatpush1.msra.mxu0 0.0
          %869 = vmatprep.subr.mxu0 0.0
          %870 = vmatpush1.msra.mxu0 0.0
          %871 = vmatprep.subr.mxu0 0.0
          %872 = vmatpush1.msra.mxu0 0.0
          %873 = vmatprep.subr.mxu0 0.0
          %874 = vmatpush1.msra.mxu0 0.0
          %875 = vmatprep.subr.mxu0 0.0
          %876 = vmatpush1.msra.mxu0 0.0
          %877 = vmatprep.subr.mxu0 0.0
          %878 = vmatpush1.msra.mxu0 0.0
          %879 = vmatprep.subr.mxu0 0.0
          %880 = vmatpush1.msra.mxu0 0.0
          %881 = vmatprep.mubr.f32.mxu0 0.0
          %882 = vmatmul.mubr.f32.gmra.mrb[0].mxu0 %v778
          %v883 = vpop.f32.mrb[0].mxu0
          %v884 = vadd.f32 %v815, %v883
          %v885 = vpop.f32.mrb[0].mxu0
          %886 = vmatprep.mubr.f32.mxu0 0.0
          %887 = vmatmul.mubr.f32.gmra.mrb[0].mxu0 %v779
          %v888 = vpop.f32.mrb[0].mxu0
          %v889 = vadd.f32 %v815, %v888
          %v890 = vpop.f32.mrb[0].mxu0
          %891 = vmatprep.mubr.f32.mxu0 0.0
          %892 = vmatmul.mubr.f32.gmra.mrb[0].mxu0 %v780
          %v893 = vpop.f32.mrb[0].mxu0
          %v894 = vadd.f32 %v815, %v893
          %v895 = vpop.f32.mrb[0].mxu0
          %896 = vmatprep.mubr.f32.mxu0 0.0
          %897 = vmatmul.mubr.f32.gmra.mrb[0].mxu0 %v781
          %v898 = vpop.f32.mrb[0].mxu0
          %v899 = vadd.f32 %v815, %v898
          %v900 = vpop.f32.mrb[0].mxu0
          %901 = vmatprep.mubr.f32.mxu0 0.0
          %902 = vmatmul.mubr.f32.gmra.mrb[0].mxu0 %v782
          %v903 = vpop.f32.mrb[0].mxu0
          %v904 = vadd.f32 %v815, %v903
          %v905 = vpop.f32.mrb[0].mxu0
          %906 = vmatprep.mubr.f32.mxu0 0.0
          %907 = vmatmul.mubr.f32.gmra.mrb[0].mxu0 %v783
          %v908 = vpop.f32.mrb[0].mxu0
          %v909 = vadd.f32 %v815, %v908
          %v910 = vpop.f32.mrb[0].mxu0
          %911 = vmatprep.mubr.f32.mxu0 0.0
          %912 = vmatmul.mubr.f32.gmra.mrb[0].mxu0 %v784
          %v913 = vpop.f32.mrb[0].mxu0
          %v914 = vadd.f32 %v815, %v913
          %v915 = vpop.f32.mrb[0].mxu0
          %916 = vmatprep.mubr.f32.mxu0 0.0
          %917 = vmatmul.mubr.f32.gmra.mrb[0].mxu0 %v785
          %v918 = vpop.f32.mrb[0].mxu0
          %v919 = vadd.f32 %v815, %v918
          %v920 = vpop.f32.mrb[0].mxu0
          %921 = vmatprep.mubr.f32.mxu0 0.0
          %922 = vmatmul.mubr.f32.gmra.mrb[0].mxu0 %v786
          %v923 = vpop.f32.mrb[0].mxu0
          %v924 = vadd.f32 %v815, %v923
          %v925 = vpop.f32.mrb[0].mxu0
          %926 = vmatprep.mubr.f32.mxu0 0.0
          %927 = vmatmul.mubr.f32.gmra.mrb[0].mxu0 %v787
          %v928 = vpop.f32.mrb[0].mxu0
          %v929 = vadd.f32 %v815, %v928
          %v930 = vpop.f32.mrb[0].mxu0
          %931 = vmatprep.mubr.f32.mxu0 0.0
          %932 = vmatmul.mubr.f32.gmra.mrb[0].mxu0 %v788
          %v933 = vpop.f32.mrb[0].mxu0
          %v934 = vadd.f32 %v815, %v933
          %v935 = vpop.f32.mrb[0].mxu0
          %936 = vmatprep.mubr.f32.mxu0 0.0
          %937 = vmatmul.mubr.f32.gmra.mrb[0].mxu0 %v789
          %v938 = vpop.f32.mrb[0].mxu0
          %v939 = vadd.f32 %v815, %v938
          %v940 = vpop.f32.mrb[0].mxu0
          %941 = vmatprep.mubr.f32.mxu0 0.0
          %942 = vmatmul.mubr.f32.gmra.mrb[0].mxu0 %v790
          %v943 = vpop.f32.mrb[0].mxu0
          %v944 = vadd.f32 %v815, %v943
          %v945 = vpop.f32.mrb[0].mxu0
          %946 = vmatprep.mubr.f32.mxu0 0.0
          %947 = vmatmul.mubr.f32.gmra.mrb[0].mxu0 %v791
          %v948 = vpop.f32.mrb[0].mxu0
          %v949 = vadd.f32 %v815, %v948
          %v950 = vpop.f32.mrb[0].mxu0
          %951 = vmatprep.mubr.f32.mxu0 0.0
          %952 = vmatmul.mubr.f32.gmra.mrb[0].mxu0 %v792
          %v953 = vpop.f32.mrb[0].mxu0
          %v954 = vadd.f32 %v815, %v953
          %v955 = vpop.f32.mrb[0].mxu0
          %956 = vmatprep.mubr.f32.mxu0 0.0
          %957 = vmatmul.mubr.f32.gmra.mrb[0].mxu0 %v793
          %v958 = vpop.f32.mrb[0].mxu0
          %v959 = vadd.f32 %v815, %v958
          %v960 = vpop.f32.mrb[0].mxu0
          %961 = vdwg.mxu0
          %v962 = vmax.f32 %v884, 0.0
          %v963 = vmax.f32 %v889, 0.0
          %v964 = vmax.f32 %v894, 0.0
          %v965 = vmax.f32 %v899, 0.0
          %v966 = vmax.f32 %v904, 0.0
          %v967 = vmax.f32 %v909, 0.0
          %v968 = vmax.f32 %v914, 0.0
          %v969 = vmax.f32 %v919, 0.0
          %v970 = vmax.f32 %v924, 0.0
          %v971 = vmax.f32 %v929, 0.0
          %v972 = vmax.f32 %v934, 0.0
          %v973 = vmax.f32 %v939, 0.0
          %v974 = vmax.f32 %v944, 0.0
          %v975 = vmax.f32 %v949, 0.0
          %v976 = vmax.f32 %v954, 0.0
          %v977 = vmax.f32 %v959, 0.0
          %v978 = vld [vmem:[%s5] sm:$0xff]
          %v979 = vld [vmem:[%s5 + $0x8] sm:$0xff]
          %v980 = vld [vmem:[%s5 + $0x10] sm:$0xff]
          %v981 = vld [vmem:[%s5 + $0x18] sm:$0xff]
          %v982 = vld [vmem:[%s5 + $0x20] sm:$0xff]
          %v983 = vld [vmem:[%s5 + $0x28] sm:$0xff]
          %v984 = vld [vmem:[%s5 + $0x30] sm:$0xff]
          %v985 = vld [vmem:[%s5 + $0x38] sm:$0xff]
          %v986 = vld [vmem:[%s5 + $0x40] sm:$0xff]
          %v987 = vld [vmem:[%s5 + $0x48] sm:$0xff]
          %v988 = vld [vmem:[%s5 + $0x50] sm:$0xff]
          %v989 = vld [vmem:[%s5 + $0x58] sm:$0xff]
          %v990 = vld [vmem:[%s5 + $0x60] sm:$0xff]
          %v991 = vld [vmem:[%s5 + $0x68] sm:$0xff]
          %v992 = vld [vmem:[%s5 + $0x70] sm:$0xff]
          %v993 = vld [vmem:[%s5 + $0x78] sm:$0xff]
          %v994 = vld [vmem:[%s6] sm:$0x1]
          %v996 = vlaneseq
          %v997 = vshrl.u32 %v996, 7
          %v998 = vsub.s32 0, %v997
          %v999 = vrot.slane %v994, %v998
          %1001 = vmatprep.subr.mxu0 0.0
          %1002 = vmatpush1.msra.mxu0 %v978
          %1003 = vmatprep.subr.mxu0 0.0
          %1004 = vmatpush1.msra.mxu0 %v979
          %1005 = vmatprep.subr.mxu0 0.0
          %1006 = vmatpush1.msra.mxu0 %v980
          %1007 = vmatprep.subr.mxu0 0.0
          %1008 = vmatpush1.msra.mxu0 %v981
          %1009 = vmatprep.subr.mxu0 0.0
          %1010 = vmatpush1.msra.mxu0 %v982
          %1011 = vmatprep.subr.mxu0 0.0
          %1012 = vmatpush1.msra.mxu0 %v983
          %1013 = vmatprep.subr.mxu0 0.0
          %1014 = vmatpush1.msra.mxu0 %v984
          %1015 = vmatprep.subr.mxu0 0.0
          %1016 = vmatpush1.msra.mxu0 %v985
          %1017 = vmatprep.subr.mxu0 0.0
          %1018 = vmatpush1.msra.mxu0 %v986
          %1019 = vmatprep.subr.mxu0 0.0
          %1020 = vmatpush1.msra.mxu0 %v987
          %1021 = vmatprep.subr.mxu0 0.0
          %1022 = vmatpush1.msra.mxu0 %v988
          %1023 = vmatprep.subr.mxu0 0.0
          %1024 = vmatpush1.msra.mxu0 %v989
          %1025 = vmatprep.subr.mxu0 0.0
          %1026 = vmatpush1.msra.mxu0 %v990
          %1027 = vmatprep.subr.mxu0 0.0
          %1028 = vmatpush1.msra.mxu0 %v991
          %1029 = vmatprep.subr.mxu0 0.0
          %1030 = vmatpush1.msra.mxu0 %v992
          %1031 = vmatprep.subr.mxu0 0.0
          %1032 = vmatpush1.msra.mxu0 %v993
          %1033 = vmatprep.subr.mxu0 0.0
          %1034 = vmatpush1.msra.mxu0 0.0
          %1035 = vmatprep.subr.mxu0 0.0
          %1036 = vmatpush1.msra.mxu0 0.0
          %1037 = vmatprep.subr.mxu0 0.0
          %1038 = vmatpush1.msra.mxu0 0.0
          %1039 = vmatprep.subr.mxu0 0.0
          %1040 = vmatpush1.msra.mxu0 0.0
          %1041 = vmatprep.subr.mxu0 0.0
          %1042 = vmatpush1.msra.mxu0 0.0
          %1043 = vmatprep.subr.mxu0 0.0
          %1044 = vmatpush1.msra.mxu0 0.0
          %1045 = vmatprep.subr.mxu0 0.0
          %1046 = vmatpush1.msra.mxu0 0.0
          %1047 = vmatprep.subr.mxu0 0.0
          %1048 = vmatpush1.msra.mxu0 0.0
          %1049 = vmatprep.subr.mxu0 0.0
          %1050 = vmatpush1.msra.mxu0 0.0
          %1051 = vmatprep.subr.mxu0 0.0
          %1052 = vmatpush1.msra.mxu0 0.0
          %1053 = vmatprep.subr.mxu0 0.0
          %1054 = vmatpush1.msra.mxu0 0.0
          %1055 = vmatprep.subr.mxu0 0.0
          %1056 = vmatpush1.msra.mxu0 0.0
          %1057 = vmatprep.subr.mxu0 0.0
          %1058 = vmatpush1.msra.mxu0 0.0
          %1059 = vmatprep.subr.mxu0 0.0
          %1060 = vmatpush1.msra.mxu0 0.0
          %1061 = vmatprep.subr.mxu0 0.0
          %1062 = vmatpush1.msra.mxu0 0.0
          %1063 = vmatprep.subr.mxu0 0.0
          %1064 = vmatpush1.msra.mxu0 0.0
          %1065 = vmatprep.mubr.f32.mxu0 0.0
          %1066 = vmatmul.mubr.f32.gmra.mrb[0].mxu0 %v962
          %v1067 = vpop.f32.mrb[0].mxu0
          %v1068 = vadd.f32 %v999, %v1067
          %v1069 = vpop.f32.mrb[0].mxu0
          %1070 = vmatprep.mubr.f32.mxu0 0.0
          %1071 = vmatmul.mubr.f32.gmra.mrb[0].mxu0 %v963
          %v1072 = vpop.f32.mrb[0].mxu0
          %v1073 = vadd.f32 %v999, %v1072
          %v1074 = vpop.f32.mrb[0].mxu0
          %1075 = vmatprep.mubr.f32.mxu0 0.0
          %1076 = vmatmul.mubr.f32.gmra.mrb[0].mxu0 %v964
          %v1077 = vpop.f32.mrb[0].mxu0
          %v1078 = vadd.f32 %v999, %v1077
          %v1079 = vpop.f32.mrb[0].mxu0
          %1080 = vmatprep.mubr.f32.mxu0 0.0
          %1081 = vmatmul.mubr.f32.gmra.mrb[0].mxu0 %v965
          %v1082 = vpop.f32.mrb[0].mxu0
          %v1083 = vadd.f32 %v999, %v1082
          %v1084 = vpop.f32.mrb[0].mxu0
          %1085 = vmatprep.mubr.f32.mxu0 0.0
          %1086 = vmatmul.mubr.f32.gmra.mrb[0].mxu0 %v966
          %v1087 = vpop.f32.mrb[0].mxu0
          %v1088 = vadd.f32 %v999, %v1087
          %v1089 = vpop.f32.mrb[0].mxu0
          %1090 = vmatprep.mubr.f32.mxu0 0.0
          %1091 = vmatmul.mubr.f32.gmra.mrb[0].mxu0 %v967
          %v1092 = vpop.f32.mrb[0].mxu0
          %v1093 = vadd.f32 %v999, %v1092
          %v1094 = vpop.f32.mrb[0].mxu0
          %1095 = vmatprep.mubr.f32.mxu0 0.0
          %1096 = vmatmul.mubr.f32.gmra.mrb[0].mxu0 %v968
          %v1097 = vpop.f32.mrb[0].mxu0
          %v1098 = vadd.f32 %v999, %v1097
          %v1099 = vpop.f32.mrb[0].mxu0
          %1100 = vmatprep.mubr.f32.mxu0 0.0
          %1101 = vmatmul.mubr.f32.gmra.mrb[0].mxu0 %v969
          %v1102 = vpop.f32.mrb[0].mxu0
          %v1103 = vadd.f32 %v999, %v1102
          %v1104 = vpop.f32.mrb[0].mxu0
          %1105 = vmatprep.mubr.f32.mxu0 0.0
          %1106 = vmatmul.mubr.f32.gmra.mrb[0].mxu0 %v970
          %v1107 = vpop.f32.mrb[0].mxu0
          %v1108 = vadd.f32 %v999, %v1107
          %v1109 = vpop.f32.mrb[0].mxu0
          %1110 = vmatprep.mubr.f32.mxu0 0.0
          %1111 = vmatmul.mubr.f32.gmra.mrb[0].mxu0 %v971
          %v1112 = vpop.f32.mrb[0].mxu0
          %v1113 = vadd.f32 %v999, %v1112
          %v1114 = vpop.f32.mrb[0].mxu0
          %1115 = vmatprep.mubr.f32.mxu0 0.0
          %1116 = vmatmul.mubr.f32.gmra.mrb[0].mxu0 %v972
          %v1117 = vpop.f32.mrb[0].mxu0
          %v1118 = vadd.f32 %v999, %v1117
          %v1119 = vpop.f32.mrb[0].mxu0
          %1120 = vmatprep.mubr.f32.mxu0 0.0
          %1121 = vmatmul.mubr.f32.gmra.mrb[0].mxu0 %v973
          %v1122 = vpop.f32.mrb[0].mxu0
          %v1123 = vadd.f32 %v999, %v1122
          %v1124 = vpop.f32.mrb[0].mxu0
          %1125 = vmatprep.mubr.f32.mxu0 0.0
          %1126 = vmatmul.mubr.f32.gmra.mrb[0].mxu0 %v974
          %v1127 = vpop.f32.mrb[0].mxu0
          %v1128 = vadd.f32 %v999, %v1127
          %v1129 = vpop.f32.mrb[0].mxu0
          %1130 = vmatprep.mubr.f32.mxu0 0.0
          %1131 = vmatmul.mubr.f32.gmra.mrb[0].mxu0 %v975
          %v1132 = vpop.f32.mrb[0].mxu0
          %v1133 = vadd.f32 %v999, %v1132
          %v1134 = vpop.f32.mrb[0].mxu0
          %1135 = vmatprep.mubr.f32.mxu0 0.0
          %1136 = vmatmul.mubr.f32.gmra.mrb[0].mxu0 %v976
          %v1137 = vpop.f32.mrb[0].mxu0
          %v1138 = vadd.f32 %v999, %v1137
          %v1139 = vpop.f32.mrb[0].mxu0
          %1140 = vmatprep.mubr.f32.mxu0 0.0
          %1141 = vmatmul.mubr.f32.gmra.mrb[0].mxu0 %v977
          %v1142 = vpop.f32.mrb[0].mxu0
          %v1143 = vadd.f32 %v999, %v1142
          %v1144 = vpop.f32.mrb[0].mxu0
          %1145 = vdwg.mxu0
          %v1146 = vmax.f32 %v1068, 0.0
          %v1147 = vmax.f32 %v1073, 0.0
          %v1148 = vmax.f32 %v1078, 0.0
          %v1149 = vmax.f32 %v1083, 0.0
          %v1150 = vmax.f32 %v1088, 0.0
          %v1151 = vmax.f32 %v1093, 0.0
          %v1152 = vmax.f32 %v1098, 0.0
          %v1153 = vmax.f32 %v1103, 0.0
          %v1154 = vmax.f32 %v1108, 0.0
          %v1155 = vmax.f32 %v1113, 0.0
          %v1156 = vmax.f32 %v1118, 0.0
          %v1157 = vmax.f32 %v1123, 0.0
          %v1158 = vmax.f32 %v1128, 0.0
          %v1159 = vmax.f32 %v1133, 0.0
          %v1160 = vmax.f32 %v1138, 0.0
          %v1161 = vmax.f32 %v1143, 0.0
          %1162 = vst [vmem:[%s501] sm:$0xff] %v1146
          %1163 = vst [vmem:[%s501 + $0x8] sm:$0xff] %v1147
          %1164 = vst [vmem:[%s501 + $0x10] sm:$0xff] %v1148
          %1165 = vst [vmem:[%s501 + $0x18] sm:$0xff] %v1149
          %1166 = vst [vmem:[%s501 + $0x20] sm:$0xff] %v1150
          %1167 = vst [vmem:[%s501 + $0x28] sm:$0xff] %v1151
          %1168 = vst [vmem:[%s501 + $0x30] sm:$0xff] %v1152
          %1169 = vst [vmem:[%s501 + $0x38] sm:$0xff] %v1153
          %1170 = vst [vmem:[%s501 + $0x40] sm:$0xff] %v1154
          %1171 = vst [vmem:[%s501 + $0x48] sm:$0xff] %v1155
          %1172 = vst [vmem:[%s501 + $0x50] sm:$0xff] %v1156
          %1173 = vst [vmem:[%s501 + $0x58] sm:$0xff] %v1157
          %1174 = vst [vmem:[%s501 + $0x60] sm:$0xff] %v1158
          %1175 = vst [vmem:[%s501 + $0x68] sm:$0xff] %v1159
          %1176 = vst [vmem:[%s501 + $0x70] sm:$0xff] %v1160
          %1177 = vst [vmem:[%s501 + $0x78] sm:$0xff] %v1161
          %v1178 = vld [vmem:[%s492] sm:$0xf]
          %v1179 = vunpack.c.l.bf16 %v1178
          %v1180 = vld [vmem:[%s506] sm:$0xff]
          %1181 = vmatprep.subr.mxu0 0.0
          %1182 = vmatpush1.msra.mxu0 %v1146
          %1183 = vmatprep.subr.mxu0 0.0
          %1184 = vmatpush1.msra.mxu0 %v1147
          %1185 = vmatprep.subr.mxu0 0.0
          %1186 = vmatpush1.msra.mxu0 %v1148
          %1187 = vmatprep.subr.mxu0 0.0
          %1188 = vmatpush1.msra.mxu0 %v1149
          %1189 = vmatprep.subr.mxu0 0.0
          %1190 = vmatpush1.msra.mxu0 %v1150
          %1191 = vmatprep.subr.mxu0 0.0
          %1192 = vmatpush1.msra.mxu0 %v1151
          %1193 = vmatprep.subr.mxu0 0.0
          %1194 = vmatpush1.msra.mxu0 %v1152
          %1195 = vmatprep.subr.mxu0 0.0
          %1196 = vmatpush1.msra.mxu0 %v1153
          %1197 = vmatprep.subr.mxu0 0.0
          %1198 = vmatpush1.msra.mxu0 %v1154
          %1199 = vmatprep.subr.mxu0 0.0
          %1200 = vmatpush1.msra.mxu0 %v1155
          %1201 = vmatprep.subr.mxu0 0.0
          %1202 = vmatpush1.msra.mxu0 %v1156
          %1203 = vmatprep.subr.mxu0 0.0
          %1204 = vmatpush1.msra.mxu0 %v1157
          %1205 = vmatprep.subr.mxu0 0.0
          %1206 = vmatpush1.msra.mxu0 %v1158
          %1207 = vmatprep.subr.mxu0 0.0
          %1208 = vmatpush1.msra.mxu0 %v1159
          %1209 = vmatprep.subr.mxu0 0.0
          %1210 = vmatpush1.msra.mxu0 %v1160
          %1211 = vmatprep.subr.mxu0 0.0
          %1212 = vmatpush1.msra.mxu0 %v1161
          %1213 = vmatprep.subr.mxu0 0.0
          %1214 = vmatpush1.msra.mxu0 0.0
          %1215 = vmatprep.subr.mxu0 0.0
          %1216 = vmatpush1.msra.mxu0 0.0
          %1217 = vmatprep.subr.mxu0 0.0
          %1218 = vmatpush1.msra.mxu0 0.0
          %1219 = vmatprep.subr.mxu0 0.0
          %1220 = vmatpush1.msra.mxu0 0.0
          %1221 = vmatprep.subr.mxu0 0.0
          %1222 = vmatpush1.msra.mxu0 0.0
          %1223 = vmatprep.subr.mxu0 0.0
          %1224 = vmatpush1.msra.mxu0 0.0
          %1225 = vmatprep.subr.mxu0 0.0
          %1226 = vmatpush1.msra.mxu0 0.0
          %1227 = vmatprep.subr.mxu0 0.0
          %1228 = vmatpush1.msra.mxu0 0.0
          %1229 = vmatprep.subr.mxu0 0.0
          %1230 = vmatpush1.msra.mxu0 0.0
          %1231 = vmatprep.subr.mxu0 0.0
          %1232 = vmatpush1.msra.mxu0 0.0
          %1233 = vmatprep.subr.mxu0 0.0
          %1234 = vmatpush1.msra.mxu0 0.0
          %1235 = vmatprep.subr.mxu0 0.0
          %1236 = vmatpush1.msra.mxu0 0.0
          %1237 = vmatprep.subr.mxu0 0.0
          %1238 = vmatpush1.msra.mxu0 0.0
          %1239 = vmatprep.subr.mxu0 0.0
          %1240 = vmatpush1.msra.mxu0 0.0
          %1241 = vmatprep.subr.mxu0 0.0
          %1242 = vmatpush1.msra.mxu0 0.0
          %1243 = vmatprep.subr.mxu0 0.0
          %1244 = vmatpush1.msra.mxu0 0.0
          %1245 = vmatprep.mubr.f32.mxu0 0.0
          %1246 = vmatmul.mubr.f32.gmra.mrb[0].mxu0 %v1179
          %v1247 = vpop.f32.mrb[0].mxu0
          %v1248 = vadd.f32 0.0, %v1247
          %v1249 = vpop.f32.mrb[0].mxu0
          %1250 = vdwg.mxu0
          %v1251 = vadd.f32 %v1180, %v1248
          %1252 = vst [vmem:[%s506] sm:$0xff] %v1251
        $region101: #{encoder_forward.3} parent=84 // pred_fallthru
          _
        %s1253 = smul.u32 16, %s26
        %p1254 = scmp.lt.s32.totalorder %s25, 1
        %s1255 = scalar_select %p1254, %s25, 1
        %p1256 = scmp.lt.s32.totalorder %s1253, 31
        %s1257 = scalar_select %p1256, %s1253, 31
        %s1258 = smul.addr %s1255, 32
        %s1259 = sadd.s32 %s1257, %s1258
        %s1260 = smul.addr %s1259, 8
        %s1261 = scalar_lea.vmem %s7, %s1260
        %p1262 = scmp.lt.s32.totalorder %s25, 1
        %s1263 = scalar_select %p1262, %s25, 1
        %s1264 = smul.addr %s1263, 8
        %s1265 = scalar_lea.vmem %s8, %s1264
        // Predicated region
        $region102: #{encoder_forward.3} parent=84 // pred_check
          %p1266 = pneg %p225
        $region103: #{encoder_forward.3} parent=84 // pred_check_branch
          %1268 = sbr.rel (%p1266) target = $region105
        $region104: #{encoder_forward.3} parent=84 // pred_region
          %s1269 = smul.u32 16, %s26
        $region105: #{encoder_forward.3} parent=84 // pred_fallthru
          _
        // Predicated region
        $region106: #{encoder_forward.3} parent=84 // pred_check
          %p1270 = pneg %p251
        $region107: #{encoder_forward.3} parent=84 // pred_check_branch
          %1272 = sbr.rel (%p1270) target = $region109
        $region108: #{encoder_forward.3} parent=84 // pred_region
          _
        $region109: #{encoder_forward.3} parent=84 // pred_fallthru
          _
      $region85: #{encoder_forward.3} parent=5 // pred_fallthru
        _
      %p1273 = scmp.le.s32.totalorder 2, %s15
      // Predicated region
      $region110: #{encoder_forward.3} parent=5 // pred_check
        %p1274 = pneg %p1273
      $region111: #{encoder_forward.3} parent=5 // pred_check_branch
        %1276 = sbr.rel (%p1274) target = $region113
      $region112: #{encoder_forward.3} parent=5 // pred_region
        %s1277 = ssub.s32 %s15, 2
        // Predicated region
        $region114: #{encoder_forward.3} parent=112 // pred_check
          %p1278 = pneg %p231
        $region115: #{encoder_forward.3} parent=112 // pred_check_branch
          %1280 = sbr.rel (%p1278) target = $region117
        $region116: #{encoder_forward.3} parent=112 // pred_region
          %s1281 = smul.u32 16, %s29
          %p1282 = scmp.lt.s32.totalorder %s28, 1
          %s1283 = scalar_select %p1282, %s28, 1
          %p1284 = scmp.lt.s32.totalorder %s1281, 31
          %s1285 = scalar_select %p1284, %s1281, 31
          %s1286 = smul.addr %s1283, 32
          %s1287 = sadd.s32 %s1285, %s1286
          %s1288 = smul.addr %s1287, 8
          %s1289 = scalar_lea.vmem %s7, %s1288
        $region117: #{encoder_forward.3} parent=112 // pred_fallthru
          _
        // Predicated region
        $region118: #{encoder_forward.3} parent=112 // pred_check
          %p1290 = pneg %p257
        $region119: #{encoder_forward.3} parent=112 // pred_check_branch
          %1292 = sbr.rel (%p1290) target = $region121
        $region120: #{encoder_forward.3} parent=112 // pred_region
          %p1293 = scmp.lt.s32.totalorder %s28, 1
          %s1294 = scalar_select %p1293, %s28, 1
          %s1295 = smul.addr %s1294, 8
          %s1296 = scalar_lea.vmem %s8, %s1295
        $region121: #{encoder_forward.3} parent=112 // pred_fallthru
          _
      $region113: #{encoder_forward.3} parent=5 // pred_fallthru
        _
    $region6: #{encoder_forward.3} parent=1 // loop_footer
      %s19 = sadd.s32 1, %s15
    $region7: #{encoder_forward.3} parent=1 // loop_footer_branch
      %14 = sbr.rel target = $region3
    $region8: #{encoder_forward.3} parent=1 // loop_exit
      _

// kernel: encoder_forward.2
$region0: #{encoder_forward.2}
  #allocation0 [shape = 'u32[]', space=smem, size = 0x4, offset = 0x4, fixed_abs, tag = 'smem constant byte address 0x4 - core index']
  #allocation1 [shape = 'u32[144,128]{1,0:T(1,128)}', space=vmem, size = 0x12000, scoped, tag = 'internal scratch']
  #allocation2 [shape = 'f32[128,128]{1,0:T(8,128)}', space=vmem, size = 0x10000, scoped, tag = 'scratch operand']
  %s0 = inlined_call_operand.vmem [shape: f32[2,256,128], index: 0, kind: input, shape index: {}]
  %s1 = inlined_call_operand.vmem [shape: bf16[256,256], index: 1, kind: input, shape index: {}]
  %s2 = inlined_call_operand.vmem [shape: f32[128,128], index: 2, kind: input, shape index: {}]
  %s3 = inlined_call_operand.vmem [shape: f32[1,128], index: 3, kind: input, shape index: {}]
  %s4 = inlined_call_operand.vmem [shape: f32[128,128], index: 4, kind: input, shape index: {}]
  %s5 = inlined_call_operand.vmem [shape: f32[1,128], index: 5, kind: input, shape index: {}]
  %s6 = inlined_call_operand.vmem [shape: f32[2,256,128], index: 6, kind: output, shape index: {}]
  %s7 = sld [smem:[#allocation0]]
  $region106: #{encoder_forward.2} parent=0
    _
  %s9 = ssub.s32 1, %s7
  %s10 = scalar_select 0, %s9, %s7
  $region1: #{encoder_forward.2} parent=0
    #allocation3 [shape = 'u8[65536]{0}', space=vmem, size = 0x10000, scoped, tag = 'input window, operand 1']
    loop: start=0, step=1, limit=10
    $region2: #{encoder_forward.2} parent=1 // loop_pre_header
      _
    $region3: #{encoder_forward.2} parent=1 // loop_header
      %s12 = sphi 0, %s16
      %p13 = scmp.ge.s32.totalorder %s12, 10
      %s19 = sphi 0, %s38
      %s20 = sphi 0, %s34
      %s21 = sphi 0, %s30
      %s22 = sphi 0, %s19
      %s23 = sphi 0, %s20
      %s24 = sphi 0, %s21
      %s25 = sphi 0, %s22
      %s26 = sphi 0, %s23
      %s27 = sphi 0, %s24
      %s43 = sphi 0, %s45
      %s46 = sphi 0, %s43
      %s47 = sphi 0, %s46
      %s63 = sphi 0, %s47
      %s71 = sphi 0, %s73
      %s74 = sphi 0, %s71
      %s75 = sphi 0, %s74
      %s91 = sphi 0, %s75
      %s95 = sphi 0, %s95
      %s97 = sphi 0, %s95
      %s98 = sphi 0, %s97
      %s112 = sphi 0, %s98
      %s116 = sphi 0, %s116
      %s118 = sphi 0, %s116
      %s119 = sphi 0, %s118
      %s133 = sphi 0, %s119
      %s137 = sphi 0, %s137
      %s139 = sphi 0, %s137
      %s140 = sphi 0, %s139
      %s154 = sphi 0, %s140
      %s158 = sphi 0, %s158
      %s160 = sphi 0, %s158
      %s161 = sphi 0, %s160
      %s175 = sphi 0, %s161
      %s183 = sphi 0, %s185
      %s186 = sphi 0, %s183
      %s187 = sphi 0, %s186
      %s203 = sphi 0, %s187
    $region4: #{encoder_forward.2} parent=1 // loop_header_branch
      %15 = sbr.rel (%p13) target = $region8
    $region5: #{encoder_forward.2} parent=1 // loop_body
      %s17 = ssub.s32 %s12, 1
      %s18 = ssub.s32 %s12, 2
      %s28 = sadd.s32 1, %s21
      %p29 = scmp.ge.s32.totalorder %s28, 2
      %s30 = scalar_select %p29, 0, %s28
      %s31 = sadd.s32 1, %s20
      %s32 = scalar_select %p29, %s31, %s20
      %p33 = scmp.ge.s32.totalorder %s32, 2
      %s34 = scalar_select %p33, 0, %s32
      %s35 = sadd.s32 1, %s19
      %s36 = scalar_select %p33, %s35, %s19
      %p37 = scmp.ge.s32.totalorder %s36, 2
      %s38 = scalar_select %p37, 0, %s36
      %s39 = ssub.s32 %s19, %s38
      %s40 = ssub.s32 %s21, %s30
      %s41 = sor.u32 %s39, %s40
      %p42 = scmp.eq.s32.totalorder %s41, 0
      %s44 = sadd.s32 %s43, 1
      %s45 = scalar_select %p42, %s43, %s44
      %p48 = pneg %p42
      %p49 = scmp.eq.s32.totalorder %s12, 7
      %p50 = por %p48, %p49
      %p51 = scmp.ne.s32.totalorder %s43, %s46
      %p52 = scmp.eq.s32.totalorder %s12, 0
      %p53 = por %p51, %p52
      %p54 = scmp.ne.s32.totalorder %s43, %s46
      %p55 = scmp.eq.s32.totalorder %s17, 7
      %p56 = por %p54, %p55
      %p57 = scmp.ne.s32.totalorder %s46, %s47
      %p58 = scmp.eq.s32.totalorder %s17, 0
      %p59 = por %p57, %p58
      %p60 = scmp.ne.s32.totalorder %s46, %s47
      %p61 = scmp.eq.s32.totalorder %s18, 7
      %p62 = por %p60, %p61
      %p64 = scmp.ne.s32.totalorder %s47, %s63
      %p65 = scmp.eq.s32.totalorder %s18, 0
      %p66 = por %p64, %p65
      %s67 = ssub.s32 %s20, %s34
      %s68 = ssub.s32 %s21, %s30
      %s69 = sor.u32 %s67, %s68
      %p70 = scmp.eq.s32.totalorder %s69, 0
      %s72 = sadd.s32 %s71, 1
      %s73 = scalar_select %p70, %s71, %s72
      %p76 = pneg %p70
      %p77 = scmp.eq.s32.totalorder %s12, 7
      %p78 = por %p76, %p77
      %p79 = scmp.ne.s32.totalorder %s71, %s74
      %p80 = scmp.eq.s32.totalorder %s12, 0
      %p81 = por %p79, %p80
      %p82 = scmp.ne.s32.totalorder %s71, %s74
      %p83 = scmp.eq.s32.totalorder %s17, 7
      %p84 = por %p82, %p83
      %p85 = scmp.ne.s32.totalorder %s74, %s75
      %p86 = scmp.eq.s32.totalorder %s17, 0
      %p87 = por %p85, %p86
      %p88 = scmp.ne.s32.totalorder %s74, %s75
      %p89 = scmp.eq.s32.totalorder %s18, 7
      %p90 = por %p88, %p89
      %p92 = scmp.ne.s32.totalorder %s75, %s91
      %p93 = scmp.eq.s32.totalorder %s18, 0
      %p94 = por %p92, %p93
      %s96 = sadd.s32 %s95, 1
      %p99 = scmp.eq.s32.totalorder %s12, 7
      %p100 = scmp.ne.s32.totalorder %s95, %s97
      %p101 = scmp.eq.s32.totalorder %s12, 0
      %p102 = por %p100, %p101
      %p103 = scmp.ne.s32.totalorder %s95, %s97
      %p104 = scmp.eq.s32.totalorder %s17, 7
      %p105 = por %p103, %p104
      %p106 = scmp.ne.s32.totalorder %s97, %s98
      %p107 = scmp.eq.s32.totalorder %s17, 0
      %p108 = por %p106, %p107
      %p109 = scmp.ne.s32.totalorder %s97, %s98
      %p110 = scmp.eq.s32.totalorder %s18, 7
      %p111 = por %p109, %p110
      %p113 = scmp.ne.s32.totalorder %s98, %s112
      %p114 = scmp.eq.s32.totalorder %s18, 0
      %p115 = por %p113, %p114
      %s117 = sadd.s32 %s116, 1
      %p120 = scmp.eq.s32.totalorder %s12, 7
      %p121 = scmp.ne.s32.totalorder %s116, %s118
      %p122 = scmp.eq.s32.totalorder %s12, 0
      %p123 = por %p121, %p122
      %p124 = scmp.ne.s32.totalorder %s116, %s118
      %p125 = scmp.eq.s32.totalorder %s17, 7
      %p126 = por %p124, %p125
      %p127 = scmp.ne.s32.totalorder %s118, %s119
      %p128 = scmp.eq.s32.totalorder %s17, 0
      %p129 = por %p127, %p128
      %p130 = scmp.ne.s32.totalorder %s118, %s119
      %p131 = scmp.eq.s32.totalorder %s18, 7
      %p132 = por %p130, %p131
      %p134 = scmp.ne.s32.totalorder %s119, %s133
      %p135 = scmp.eq.s32.totalorder %s18, 0
      %p136 = por %p134, %p135
      %s138 = sadd.s32 %s137, 1
      %p141 = scmp.eq.s32.totalorder %s12, 7
      %p142 = scmp.ne.s32.totalorder %s137, %s139
      %p143 = scmp.eq.s32.totalorder %s12, 0
      %p144 = por %p142, %p143
      %p145 = scmp.ne.s32.totalorder %s137, %s139
      %p146 = scmp.eq.s32.totalorder %s17, 7
      %p147 = por %p145, %p146
      %p148 = scmp.ne.s32.totalorder %s139, %s140
      %p149 = scmp.eq.s32.totalorder %s17, 0
      %p150 = por %p148, %p149
      %p151 = scmp.ne.s32.totalorder %s139, %s140
      %p152 = scmp.eq.s32.totalorder %s18, 7
      %p153 = por %p151, %p152
      %p155 = scmp.ne.s32.totalorder %s140, %s154
      %p156 = scmp.eq.s32.totalorder %s18, 0
      %p157 = por %p155, %p156
      %s159 = sadd.s32 %s158, 1
      %p162 = scmp.eq.s32.totalorder %s12, 7
      %p163 = scmp.ne.s32.totalorder %s158, %s160
      %p164 = scmp.eq.s32.totalorder %s12, 0
      %p165 = por %p163, %p164
      %p166 = scmp.ne.s32.totalorder %s158, %s160
      %p167 = scmp.eq.s32.totalorder %s17, 7
      %p168 = por %p166, %p167
      %p169 = scmp.ne.s32.totalorder %s160, %s161
      %p170 = scmp.eq.s32.totalorder %s17, 0
      %p171 = por %p169, %p170
      %p172 = scmp.ne.s32.totalorder %s160, %s161
      %p173 = scmp.eq.s32.totalorder %s18, 7
      %p174 = por %p172, %p173
      %p176 = scmp.ne.s32.totalorder %s161, %s175
      %p177 = scmp.eq.s32.totalorder %s18, 0
      %p178 = por %p176, %p177
      %s179 = ssub.s32 %s19, %s38
      %s180 = ssub.s32 %s20, %s34
      %s181 = sor.u32 %s179, %s180
      %p182 = scmp.eq.s32.totalorder %s181, 0
      %s184 = sadd.s32 %s183, 1
      %s185 = scalar_select %p182, %s183, %s184
      %p188 = pneg %p182
      %p189 = scmp.eq.s32.totalorder %s12, 7
      %p190 = por %p188, %p189
      %p191 = scmp.ne.s32.totalorder %s183, %s186
      %p192 = scmp.eq.s32.totalorder %s12, 0
      %p193 = por %p191, %p192
      %p194 = scmp.ne.s32.totalorder %s183, %s186
      %p195 = scmp.eq.s32.totalorder %s17, 7
      %p196 = por %p194, %p195
      %p197 = scmp.ne.s32.totalorder %s186, %s187
      %p198 = scmp.eq.s32.totalorder %s17, 0
      %p199 = por %p197, %p198
      %p200 = scmp.ne.s32.totalorder %s186, %s187
      %p201 = scmp.eq.s32.totalorder %s18, 7
      %p202 = por %p200, %p201
      %p204 = scmp.ne.s32.totalorder %s187, %s203
      %p205 = scmp.eq.s32.totalorder %s18, 0
      %p206 = por %p204, %p205
      %p207 = scmp.le.s32.totalorder 1, %s12
      %p208 = scmp.lt.s32.totalorder %s12, 9
      %p209 = pnand %p207, %p208
      %p210 = pneg %p209
      // Predicated region
      $region9: #{encoder_forward.2} parent=5 // pred_check
        _
      $region10: #{encoder_forward.2} parent=5 // pred_check_branch
        %212 = sbr.rel (%p209) target = $region12
      $region11: #{encoder_forward.2} parent=5 // pred_region
        %s213 = ssub.s32 %s12, 1
        // Predicated region
        $region13: #{encoder_forward.2} parent=11 // pred_check
          %p214 = pneg %p108
        $region14: #{encoder_forward.2} parent=11 // pred_check_branch
          %216 = sbr.rel (%p214) target = $region16
        $region15: #{encoder_forward.2} parent=11 // pred_region
          _
        $region16: #{encoder_forward.2} parent=11 // pred_fallthru
          _
        // Predicated region
        $region17: #{encoder_forward.2} parent=11 // pred_check
          %p217 = pneg %p129
        $region18: #{encoder_forward.2} parent=11 // pred_check_branch
          %219 = sbr.rel (%p217) target = $region20
        $region19: #{encoder_forward.2} parent=11 // pred_region
          _
        $region20: #{encoder_forward.2} parent=11 // pred_fallthru
          _
        // Predicated region
        $region21: #{encoder_forward.2} parent=11 // pred_check
          %p220 = pneg %p150
        $region22: #{encoder_forward.2} parent=11 // pred_check_branch
          %222 = sbr.rel (%p220) target = $region24
        $region23: #{encoder_forward.2} parent=11 // pred_region
          _
        $region24: #{encoder_forward.2} parent=11 // pred_fallthru
          _
        // Predicated region
        $region25: #{encoder_forward.2} parent=11 // pred_check
          %p223 = pneg %p171
        $region26: #{encoder_forward.2} parent=11 // pred_check_branch
          %225 = sbr.rel (%p223) target = $region28
        $region27: #{encoder_forward.2} parent=11 // pred_region
          _
        $region28: #{encoder_forward.2} parent=11 // pred_fallthru
          _
      $region12: #{encoder_forward.2} parent=5 // pred_fallthru
        _
      %p226 = scmp.lt.s32.totalorder %s12, 8
      // Predicated region
      $region29: #{encoder_forward.2} parent=5 // pred_check
        %p227 = pneg %p226
      $region30: #{encoder_forward.2} parent=5 // pred_check_branch
        %229 = sbr.rel (%p227) target = $region32
      $region31: #{encoder_forward.2} parent=5 // pred_region
        // Predicated region
        $region33: #{encoder_forward.2} parent=31 // pred_check
          %p230 = pneg %p53
        $region34: #{encoder_forward.2} parent=31 // pred_check_branch
          %232 = sbr.rel (%p230) target = $region36
        $region35: #{encoder_forward.2} parent=31 // pred_region
          %s233 = smul.u32 16, %s21
          %p234 = scmp.lt.s32.totalorder %s19, 1
          %s235 = scalar_select %p234, %s19, 1
          %p236 = scmp.lt.s32.totalorder %s233, 31
          %s237 = scalar_select %p236, %s233, 31
          %s238 = smul.addr %s235, 32
          %s239 = sadd.s32 %s237, %s238
          %s240 = smul.addr %s239, 8
          %s241 = scalar_lea.vmem %s0, %s240
          %s242 = smul.u32 16, %s21
        $region36: #{encoder_forward.2} parent=31 // pred_fallthru
          _
        // Predicated region
        $region37: #{encoder_forward.2} parent=31 // pred_check
          %p243 = pneg %p81
        $region38: #{encoder_forward.2} parent=31 // pred_check_branch
          %245 = sbr.rel (%p243) target = $region40
        $region39: #{encoder_forward.2} parent=31 // pred_region
          %s246 = sand.u32 %s71, 1
          %s247 = sand.u32 %s71, 1
          %s248 = smul.addr %s247, 64
          %s249 = scalar_lea.vmem [#allocation3], %s248
          %s250 = smul.u32 16, %s20
          %s251 = smul.addr %s250, 2
          %s252 = sadd.s32 %s21, %s251
          %s253 = smul.addr %s252, 4
          %s254 = scalar_lea.vmem %s1, %s253
          // Predicated region
          $region41: #{encoder_forward.2} parent=39 // pred_check
            _
          $region42: #{encoder_forward.2} parent=39 // pred_check_branch
            %256 = sbr.rel (0) target = $region44
          $region43: #{encoder_forward.2} parent=39 // pred_region
            // Predicated region
            $region45: #{encoder_forward.2} parent=43 // pred_check
              _
            $region46: #{encoder_forward.2} parent=43 // pred_check_branch
              %258 = sbr.rel target = $region48
            $region47: #{encoder_forward.2} parent=43 // pred_region
              // Predicated region
              $region60: #{encoder_forward.2} parent=47 // pred_check
                _
              $region61: #{encoder_forward.2} parent=47 // pred_check_branch
                %303 = sbr.rel (0) target = $region63
              $region62: #{encoder_forward.2} parent=47 // pred_region
                loop: start=0, step=1, limit=1
                $region64: #{encoder_forward.2} parent=62 // loop_pre_header
                  _
                $region65: #{encoder_forward.2} parent=62 // loop_header
                  %s305 = sphi 0, %s309
                  %p306 = scmp.ge.s32.totalorder %s305, 1
                  %s310 = sphi %s254, %s254
                  %s311 = sphi %s249, %s249
                $region66: #{encoder_forward.2} parent=62 // loop_header_branch
                  %308 = sbr.rel (%p306) target = $region70
                $region67: #{encoder_forward.2} parent=62 // loop_body
                  _
                $region68: #{encoder_forward.2} parent=62 // loop_footer
                  %s309 = sadd.s32 1, %s305
                $region69: #{encoder_forward.2} parent=62 // loop_footer_branch
                  %304 = sbr.rel target = $region65
                $region70: #{encoder_forward.2} parent=62 // loop_exit
                  _
                loop: start=0, step=1, limit=1
                $region71: #{encoder_forward.2} parent=62 // loop_pre_header
                  _
                $region72: #{encoder_forward.2} parent=62 // loop_header
                  %s314 = sphi 0, %s318
                  %p315 = scmp.ge.s32.totalorder %s314, 1
                  %s319 = sphi %s254, %s254
                  %s320 = sphi %s249, %s249
                $region73: #{encoder_forward.2} parent=62 // loop_header_branch
                  %317 = sbr.rel (%p315) target = $region77
                $region74: #{encoder_forward.2} parent=62 // loop_body
                  %v321 = vld [vmem:[%s319] sm:$0xf]
                  %322 = vst [vmem:[%s320] sm:$0xf] %v321
                  %v323 = vld [vmem:[%s319 + $0x8] sm:$0xf]
                  %324 = vst [vmem:[%s320 + $0x4] sm:$0xf] %v323
                  %v325 = vld [vmem:[%s319 + $0x10] sm:$0xf]
                  %326 = vst [vmem:[%s320 + $0x8] sm:$0xf] %v325
                  %v327 = vld [vmem:[%s319 + $0x18] sm:$0xf]
                  %328 = vst [vmem:[%s320 + $0xc] sm:$0xf] %v327
                  %v329 = vld [vmem:[%s319 + $0x20] sm:$0xf]
                  %330 = vst [vmem:[%s320 + $0x10] sm:$0xf] %v329
                  %v331 = vld [vmem:[%s319 + $0x28] sm:$0xf]
                  %332 = vst [vmem:[%s320 + $0x14] sm:$0xf] %v331
                  %v333 = vld [vmem:[%s319 + $0x30] sm:$0xf]
                  %334 = vst [vmem:[%s320 + $0x18] sm:$0xf] %v333
                  %v335 = vld [vmem:[%s319 + $0x38] sm:$0xf]
                  %336 = vst [vmem:[%s320 + $0x1c] sm:$0xf] %v335
                  %v337 = vld [vmem:[%s319 + $0x40] sm:$0xf]
                  %338 = vst [vmem:[%s320 + $0x20] sm:$0xf] %v337
                  %v339 = vld [vmem:[%s319 + $0x48] sm:$0xf]
                  %340 = vst [vmem:[%s320 + $0x24] sm:$0xf] %v339
                  %v341 = vld [vmem:[%s319 + $0x50] sm:$0xf]
                  %342 = vst [vmem:[%s320 + $0x28] sm:$0xf] %v341
                  %v343 = vld [vmem:[%s319 + $0x58] sm:$0xf]
                  %344 = vst [vmem:[%s320 + $0x2c] sm:$0xf] %v343
                  %v345 = vld [vmem:[%s319 + $0x60] sm:$0xf]
                  %346 = vst [vmem:[%s320 + $0x30] sm:$0xf] %v345
                  %v347 = vld [vmem:[%s319 + $0x68] sm:$0xf]
                  %348 = vst [vmem:[%s320 + $0x34] sm:$0xf] %v347
                  %v349 = vld [vmem:[%s319 + $0x70] sm:$0xf]
                  %350 = vst [vmem:[%s320 + $0x38] sm:$0xf] %v349
                  %v351 = vld [vmem:[%s319 + $0x78] sm:$0xf]
                  %352 = vst [vmem:[%s320 + $0x3c] sm:$0xf] %v351
                $region75: #{encoder_forward.2} parent=62 // loop_footer
                  %s318 = sadd.s32 1, %s314
                $region76: #{encoder_forward.2} parent=62 // loop_footer_branch
                  %313 = sbr.rel target = $region72
                $region77: #{encoder_forward.2} parent=62 // loop_exit
                  _
              $region63: #{encoder_forward.2} parent=47 // pred_fallthru
                _
            $region48: #{encoder_forward.2} parent=43 // pred_fallthru
              _
            // Predicated region
            $region49: #{encoder_forward.2} parent=43 // pred_check
              _
            $region50: #{encoder_forward.2} parent=43 // pred_check_branch
              %260 = sbr.rel (0) target = $region52
            $region51: #{encoder_forward.2} parent=43 // pred_region
              loop: start=0, step=1, limit=1
              $region53: #{encoder_forward.2} parent=51 // loop_pre_header
                _
              $region54: #{encoder_forward.2} parent=51 // loop_header
                %s263 = sphi 0, %s267
                %p264 = scmp.ge.s32.totalorder %s263, 1
                %s268 = sphi %s254, %s254
                %s269 = sphi %s249, %s249
              $region55: #{encoder_forward.2} parent=51 // loop_header_branch
                %266 = sbr.rel (%p264) target = $region59
              $region56: #{encoder_forward.2} parent=51 // loop_body
                %v270 = vld [vmem:[%s268] sm:$0xf]
                %271 = vst [vmem:[%s269] sm:$0xf] %v270
                %v272 = vld [vmem:[%s268 + $0x8] sm:$0xf]
                %273 = vst [vmem:[%s269 + $0x4] sm:$0xf] %v272
                %v274 = vld [vmem:[%s268 + $0x10] sm:$0xf]
                %275 = vst [vmem:[%s269 + $0x8] sm:$0xf] %v274
                %v276 = vld [vmem:[%s268 + $0x18] sm:$0xf]
                %277 = vst [vmem:[%s269 + $0xc] sm:$0xf] %v276
                %v278 = vld [vmem:[%s268 + $0x20] sm:$0xf]
                %279 = vst [vmem:[%s269 + $0x10] sm:$0xf] %v278
                %v280 = vld [vmem:[%s268 + $0x28] sm:$0xf]
                %281 = vst [vmem:[%s269 + $0x14] sm:$0xf] %v280
                %v282 = vld [vmem:[%s268 + $0x30] sm:$0xf]
                %283 = vst [vmem:[%s269 + $0x18] sm:$0xf] %v282
                %v284 = vld [vmem:[%s268 + $0x38] sm:$0xf]
                %285 = vst [vmem:[%s269 + $0x1c] sm:$0xf] %v284
                %v286 = vld [vmem:[%s268 + $0x40] sm:$0xf]
                %287 = vst [vmem:[%s269 + $0x20] sm:$0xf] %v286
                %v288 = vld [vmem:[%s268 + $0x48] sm:$0xf]
                %289 = vst [vmem:[%s269 + $0x24] sm:$0xf] %v288
                %v290 = vld [vmem:[%s268 + $0x50] sm:$0xf]
                %291 = vst [vmem:[%s269 + $0x28] sm:$0xf] %v290
                %v292 = vld [vmem:[%s268 + $0x58] sm:$0xf]
                %293 = vst [vmem:[%s269 + $0x2c] sm:$0xf] %v292
                %v294 = vld [vmem:[%s268 + $0x60] sm:$0xf]
                %295 = vst [vmem:[%s269 + $0x30] sm:$0xf] %v294
                %v296 = vld [vmem:[%s268 + $0x68] sm:$0xf]
                %297 = vst [vmem:[%s269 + $0x34] sm:$0xf] %v296
                %v298 = vld [vmem:[%s268 + $0x70] sm:$0xf]
                %299 = vst [vmem:[%s269 + $0x38] sm:$0xf] %v298
                %v300 = vld [vmem:[%s268 + $0x78] sm:$0xf]
                %301 = vst [vmem:[%s269 + $0x3c] sm:$0xf] %v300
              $region57: #{encoder_forward.2} parent=51 // loop_footer
                %s267 = sadd.s32 1, %s263
              $region58: #{encoder_forward.2} parent=51 // loop_footer_branch
                %262 = sbr.rel target = $region54
              $region59: #{encoder_forward.2} parent=51 // loop_exit
                _
            $region52: #{encoder_forward.2} parent=43 // pred_fallthru
              _
          $region44: #{encoder_forward.2} parent=39 // pred_fallthru
            _
          %353 = vnop
        $region40: #{encoder_forward.2} parent=31 // pred_fallthru
          _
      $region32: #{encoder_forward.2} parent=5 // pred_fallthru
        _
      %p354 = scmp.le.s32.totalorder 1, %s12
      %p355 = scmp.lt.s32.totalorder %s12, 9
      %p356 = pnand %p354, %p355
      %p357 = pneg %p356
      // Predicated region
      $region78: #{encoder_forward.2} parent=5 // pred_check
        _
      $region79: #{encoder_forward.2} parent=5 // pred_check_branch
        %359 = sbr.rel (%p356) target = $region81
      $region80: #{encoder_forward.2} parent=5 // pred_region
        %s360 = ssub.s32 %s12, 1
        %s361 = sand.u32 %s74, 1
        %s362 = sand.u32 %s74, 1
        %s363 = smul.addr %s362, 64
        %s364 = scalar_lea.vmem [#allocation3], %s363
        // Predicated region
        $region82: #{encoder_forward.2} parent=80 // pred_check
          %p365 = pneg %p87
        $region83: #{encoder_forward.2} parent=80 // pred_check_branch
          %367 = sbr.rel (%p365) target = $region85
        $region84: #{encoder_forward.2} parent=80 // pred_region
          _
        $region85: #{encoder_forward.2} parent=80 // pred_fallthru
          _
        %s368 = smul.u32 16, %s24
        %p369 = scmp.lt.s32.totalorder %s22, 1
        %s370 = scalar_select %p369, %s22, 1
        %p371 = scmp.lt.s32.totalorder %s368, 31
        %s372 = scalar_select %p371, %s368, 31
        %s373 = smul.addr %s370, 32
        %s374 = sadd.s32 %s372, %s373
        %s375 = smul.addr %s374, 8
        %s376 = scalar_lea.vmem %s0, %s375
        %p377 = pneg %p59
        %p378 = pneg %p56
        %s379 = sand.u32 %s74, 1
        %s380 = sand.u32 %s74, 1
        %s381 = smul.addr %s380, 64
        %s382 = scalar_lea.vmem [#allocation3], %s381
        %p383 = pneg %p87
        %p384 = pneg %p84
        %p385 = pneg %p108
        %p386 = pneg %p105
        %p387 = pneg %p129
        %p388 = pneg %p126
        %p389 = pneg %p150
        %p390 = pneg %p147
        %p391 = pneg %p171
        %p392 = pneg %p168
        %p393 = pneg %p199
        %p394 = pneg %p196
        %s395 = smul.u32 16, %s23
        %p396 = scmp.lt.s32.totalorder %s22, 1
        %s397 = scalar_select %p396, %s22, 1
        %p398 = scmp.lt.s32.totalorder %s395, 31
        %s399 = scalar_select %p398, %s395, 31
        %s400 = smul.addr %s397, 32
        %s401 = sadd.s32 %s399, %s400
        %s402 = smul.addr %s401, 8
        %s403 = scalar_lea.vmem %s6, %s402
        %s404 = smul.u32 16, %s24
        %p405 = scmp.lt.s32.totalorder %s22, 1
        %s406 = scalar_select %p405, %s22, 1
        %p407 = scmp.lt.s32.totalorder %s404, 31
        %s408 = scalar_select %p407, %s404, 31
        %s409 = smul.addr %s406, 32
        %s410 = sadd.s32 %s408, %s409
        %s411 = smul.addr %s410, 8
        %s412 = scalar_lea.vmem %s0, %s411
        %s413 = smul.u32 16, %s24
        %s414 = smul.u32 16, %s23
        %s415 = smul.u32 16, %s23
        %p416 = scmp.lt.s32.totalorder %s22, 1
        %s417 = scalar_select %p416, %s22, 1
        %p418 = scmp.lt.s32.totalorder %s415, 31
        %s419 = scalar_select %p418, %s415, 31
        %s420 = smul.addr %s417, 32
        %s421 = sadd.s32 %s419, %s420
        %s422 = smul.addr %s421, 8
        %s423 = scalar_lea.vmem %s6, %s422
        %s424 = smul.u32 16, %s23
        %p425 = scmp.eq.s32.totalorder %s24, 0
        // Predicated region
        $region86: #{encoder_forward.2} parent=80 // pred_check
          %p426 = pneg %p425
        $region87: #{encoder_forward.2} parent=80 // pred_check_branch
          %428 = sbr.rel (%p426) target = $region89
        $region88: #{encoder_forward.2} parent=80 // pred_region
          %429 = vst [vmem:[#allocation2] sm:$0xff] 0.0
          %430 = vst [vmem:[#allocation2 + $0x8] sm:$0xff] 0.0
          %431 = vst [vmem:[#allocation2 + $0x10] sm:$0xff] 0.0
          %432 = vst [vmem:[#allocation2 + $0x18] sm:$0xff] 0.0
          %433 = vst [vmem:[#allocation2 + $0x20] sm:$0xff] 0.0
          %434 = vst [vmem:[#allocation2 + $0x28] sm:$0xff] 0.0
          %435 = vst [vmem:[#allocation2 + $0x30] sm:$0xff] 0.0
          %436 = vst [vmem:[#allocation2 + $0x38] sm:$0xff] 0.0
          %437 = vst [vmem:[#allocation2 + $0x40] sm:$0xff] 0.0
          %438 = vst [vmem:[#allocation2 + $0x48] sm:$0xff] 0.0
          %439 = vst [vmem:[#allocation2 + $0x50] sm:$0xff] 0.0
          %440 = vst [vmem:[#allocation2 + $0x58] sm:$0xff] 0.0
          %441 = vst [vmem:[#allocation2 + $0x60] sm:$0xff] 0.0
          %442 = vst [vmem:[#allocation2 + $0x68] sm:$0xff] 0.0
          %443 = vst [vmem:[#allocation2 + $0x70] sm:$0xff] 0.0
          %444 = vst [vmem:[#allocation2 + $0x78] sm:$0xff] 0.0
        $region89: #{encoder_forward.2} parent=80 // pred_fallthru
          _
        %v445 = vld [vmem:[%s364] sm:$0xf]
        %v446 = vld [vmem:[%s364 + $0x4] sm:$0xf]
        %v447 = vld [vmem:[%s364 + $0x8] sm:$0xf]
        %v448 = vld [vmem:[%s364 + $0xc] sm:$0xf]
        %v449 = vld [vmem:[%s364 + $0x10] sm:$0xf]
        %v450 = vld [vmem:[%s364 + $0x14] sm:$0xf]
        %v451 = vld [vmem:[%s364 + $0x18] sm:$0xf]
        %v452 = vld [vmem:[%s364 + $0x1c] sm:$0xf]
        %v453 = vld [vmem:[%s364 + $0x20] sm:$0xf]
        %v454 = vld [vmem:[%s364 + $0x24] sm:$0xf]
        %v455 = vld [vmem:[%s364 + $0x28] sm:$0xf]
        %v456 = vld [vmem:[%s364 + $0x2c] sm:$0xf]
        %v457 = vld [vmem:[%s364 + $0x30] sm:$0xf]
        %v458 = vld [vmem:[%s364 + $0x34] sm:$0xf]
        %v459 = vld [vmem:[%s364 + $0x38] sm:$0xf]
        %v460 = vld [vmem:[%s364 + $0x3c] sm:$0xf]
        %v461 = vunpack.c.l.bf16 %v445
        %v462 = vunpack.c.l.bf16 %v446
        %v463 = vunpack.c.l.bf16 %v447
        %v464 = vunpack.c.l.bf16 %v448
        %v465 = vunpack.c.l.bf16 %v449
        %v466 = vunpack.c.l.bf16 %v450
        %v467 = vunpack.c.l.bf16 %v451
        %v468 = vunpack.c.l.bf16 %v452
        %v469 = vunpack.c.l.bf16 %v453
        %v470 = vunpack.c.l.bf16 %v454
        %v471 = vunpack.c.l.bf16 %v455
        %v472 = vunpack.c.l.bf16 %v456
        %v473 = vunpack.c.l.bf16 %v457
        %v474 = vunpack.c.l.bf16 %v458
        %v475 = vunpack.c.l.bf16 %v459
        %v476 = vunpack.c.l.bf16 %v460
        %v477 = vld [vmem:[#allocation2] sm:$0xff]
        %v478 = vld [vmem:[#allocation2 + $0x8] sm:$0xff]
        %v479 = vld [vmem:[#allocation2 + $0x10] sm:$0xff]
        %v480 = vld [vmem:[#allocation2 + $0x18] sm:$0xff]
        %v481 = vld [vmem:[#allocation2 + $0x20] sm:$0xff]
        %v482 = vld [vmem:[#allocation2 + $0x28] sm:$0xff]
        %v483 = vld [vmem:[#allocation2 + $0x30] sm:$0xff]
        %v484 = vld [vmem:[#allocation2 + $0x38] sm:$0xff]
        %v485 = vld [vmem:[#allocation2 + $0x40] sm:$0xff]
        %v486 = vld [vmem:[#allocation2 + $0x48] sm:$0xff]
        %v487 = vld [vmem:[#allocation2 + $0x50] sm:$0xff]
        %v488 = vld [vmem:[#allocation2 + $0x58] sm:$0xff]
        %v489 = vld [vmem:[#allocation2 + $0x60] sm:$0xff]
        %v490 = vld [vmem:[#allocation2 + $0x68] sm:$0xff]
        %v491 = vld [vmem:[#allocation2 + $0x70] sm:$0xff]
        %v492 = vld [vmem:[#allocation2 + $0x78] sm:$0xff]
        %v493 = vld [vmem:[%s412] sm:$0xff]
        %v494 = vld [vmem:[%s412 + $0x8] sm:$0xff]
        %v495 = vld [vmem:[%s412 + $0x10] sm:$0xff]
        %v496 = vld [vmem:[%s412 + $0x18] sm:$0xff]
        %v497 = vld [vmem:[%s412 + $0x20] sm:$0xff]
        %v498 = vld [vmem:[%s412 + $0x28] sm:$0xff]
        %v499 = vld [vmem:[%s412 + $0x30] sm:$0xff]
        %v500 = vld [vmem:[%s412 + $0x38] sm:$0xff]
        %v501 = vld [vmem:[%s412 + $0x40] sm:$0xff]
        %v502 = vld [vmem:[%s412 + $0x48] sm:$0xff]
        %v503 = vld [vmem:[%s412 + $0x50] sm:$0xff]
        %v504 = vld [vmem:[%s412 + $0x58] sm:$0xff]
        %v505 = vld [vmem:[%s412 + $0x60] sm:$0xff]
        %v506 = vld [vmem:[%s412 + $0x68] sm:$0xff]
        %v507 = vld [vmem:[%s412 + $0x70] sm:$0xff]
        %v508 = vld [vmem:[%s412 + $0x78] sm:$0xff]
        %509 = vmatprep.subr.mxu0 0.0
        %510 = vmatpush1.msra.mxu0 %v493
        %511 = vmatprep.subr.mxu0 0.0
        %512 = vmatpush1.msra.mxu0 %v494
        %513 = vmatprep.subr.mxu0 0.0
        %514 = vmatpush1.msra.mxu0 %v495
        %515 = vmatprep.subr.mxu0 0.0
        %516 = vmatpush1.msra.mxu0 %v496
        %517 = vmatprep.subr.mxu0 0.0
        %518 = vmatpush1.msra.mxu0 %v497
        %519 = vmatprep.subr.mxu0 0.0
        %520 = vmatpush1.msra.mxu0 %v498
        %521 = vmatprep.subr.mxu0 0.0
        %522 = vmatpush1.msra.mxu0 %v499
        %523 = vmatprep.subr.mxu0 0.0
        %524 = vmatpush1.msra.mxu0 %v500
        %525 = vmatprep.subr.mxu0 0.0
        %526 = vmatpush1.msra.mxu0 %v501
        %527 = vmatprep.subr.mxu0 0.0
        %528 = vmatpush1.msra.mxu0 %v502
        %529 = vmatprep.subr.mxu0 0.0
        %530 = vmatpush1.msra.mxu0 %v503
        %531 = vmatprep.subr.mxu0 0.0
        %532 = vmatpush1.msra.mxu0 %v504
        %533 = vmatprep.subr.mxu0 0.0
        %534 = vmatpush1.msra.mxu0 %v505
        %535 = vmatprep.subr.mxu0 0.0
        %536 = vmatpush1.msra.mxu0 %v506
        %537 = vmatprep.subr.mxu0 0.0
        %538 = vmatpush1.msra.mxu0 %v507
        %539 = vmatprep.subr.mxu0 0.0
        %540 = vmatpush1.msra.mxu0 %v508
        %541 = vmatprep.subr.mxu0 0.0
        %542 = vmatpush1.msra.mxu0 0.0
        %543 = vmatprep.subr.mxu0 0.0
        %544 = vmatpush1.msra.mxu0 0.0
        %545 = vmatprep.subr.mxu0 0.0
        %546 = vmatpush1.msra.mxu0 0.0
        %547 = vmatprep.subr.mxu0 0.0
        %548 = vmatpush1.msra.mxu0 0.0
        %549 = vmatprep.subr.mxu0 0.0
        %550 = vmatpush1.msra.mxu0 0.0
        %551 = vmatprep.subr.mxu0 0.0
        %552 = vmatpush1.msra.mxu0 0.0
        %553 = vmatprep.subr.mxu0 0.0
        %554 = vmatpush1.msra.mxu0 0.0
        %555 = vmatprep.subr.mxu0 0.0
        %556 = vmatpush1.msra.mxu0 0.0
        %557 = vmatprep.subr.mxu0 0.0
        %558 = vmatpush1.msra.mxu0 0.0
        %559 = vmatprep.subr.mxu0 0.0
        %560 = vmatpush1.msra.mxu0 0.0
        %561 = vmatprep.subr.mxu0 0.0
        %562 = vmatpush1.msra.mxu0 0.0
        %563 = vmatprep.subr.mxu0 0.0
        %564 = vmatpush1.msra.mxu0 0.0
        %565 = vmatprep.subr.mxu0 0.0
        %566 = vmatpush1.msra.mxu0 0.0
        %567 = vmatprep.subr.mxu0 0.0
        %568 = vmatpush1.msra.mxu0 0.0
        %569 = vmatprep.subr.mxu0 0.0
        %570 = vmatpush1.msra.mxu0 0.0
        %571 = vmatprep.subr.mxu0 0.0
        %572 = vmatpush1.msra.mxu0 0.0
        %573 = vmatprep.mubr.f32.mxu0 0.0
        %574 = vmatmul.mubr.f32.gmra.mrb[0].mxu0 %v461
        %v575 = vpop.f32.mrb[0].mxu0
        %v576 = vadd.f32 0.0, %v575
        %v577 = vpop.f32.mrb[0].mxu0
        %578 = vmatprep.mubr.f32.mxu0 0.0
        %579 = vmatmul.mubr.f32.gmra.mrb[0].mxu0 %v462
        %v580 = vpop.f32.mrb[0].mxu0
        %v581 = vadd.f32 0.0, %v580
        %v582 = vpop.f32.mrb[0].mxu0
        %583 = vmatprep.mubr.f32.mxu0 0.0
        %584 = vmatmul.mubr.f32.gmra.mrb[0].mxu0 %v463
        %v585 = vpop.f32.mrb[0].mxu0
        %v586 = vadd.f32 0.0, %v585
        %v587 = vpop.f32.mrb[0].mxu0
        %588 = vmatprep.mubr.f32.mxu0 0.0
        %589 = vmatmul.mubr.f32.gmra.mrb[0].mxu0 %v464
        %v590 = vpop.f32.mrb[0].mxu0
        %v591 = vadd.f32 0.0, %v590
        %v592 = vpop.f32.mrb[0].mxu0
        %593 = vmatprep.mubr.f32.mxu0 0.0
        %594 = vmatmul.mubr.f32.gmra.mrb[0].mxu0 %v465
        %v595 = vpop.f32.mrb[0].mxu0
        %v596 = vadd.f32 0.0, %v595
        %v597 = vpop.f32.mrb[0].mxu0
        %598 = vmatprep.mubr.f32.mxu0 0.0
        %599 = vmatmul.mubr.f32.gmra.mrb[0].mxu0 %v466
        %v600 = vpop.f32.mrb[0].mxu0
        %v601 = vadd.f32 0.0, %v600
        %v602 = vpop.f32.mrb[0].mxu0
        %603 = vmatprep.mubr.f32.mxu0 0.0
        %604 = vmatmul.mubr.f32.gmra.mrb[0].mxu0 %v467
        %v605 = vpop.f32.mrb[0].mxu0
        %v606 = vadd.f32 0.0, %v605
        %v607 = vpop.f32.mrb[0].mxu0
        %608 = vmatprep.mubr.f32.mxu0 0.0
        %609 = vmatmul.mubr.f32.gmra.mrb[0].mxu0 %v468
        %v610 = vpop.f32.mrb[0].mxu0
        %v611 = vadd.f32 0.0, %v610
        %v612 = vpop.f32.mrb[0].mxu0
        %613 = vmatprep.mubr.f32.mxu0 0.0
        %614 = vmatmul.mubr.f32.gmra.mrb[0].mxu0 %v469
        %v615 = vpop.f32.mrb[0].mxu0
        %v616 = vadd.f32 0.0, %v615
        %v617 = vpop.f32.mrb[0].mxu0
        %618 = vmatprep.mubr.f32.mxu0 0.0
        %619 = vmatmul.mubr.f32.gmra.mrb[0].mxu0 %v470
        %v620 = vpop.f32.mrb[0].mxu0
        %v621 = vadd.f32 0.0, %v620
        %v622 = vpop.f32.mrb[0].mxu0
        %623 = vmatprep.mubr.f32.mxu0 0.0
        %624 = vmatmul.mubr.f32.gmra.mrb[0].mxu0 %v471
        %v625 = vpop.f32.mrb[0].mxu0
        %v626 = vadd.f32 0.0, %v625
        %v627 = vpop.f32.mrb[0].mxu0
        %628 = vmatprep.mubr.f32.mxu0 0.0
        %629 = vmatmul.mubr.f32.gmra.mrb[0].mxu0 %v472
        %v630 = vpop.f32.mrb[0].mxu0
        %v631 = vadd.f32 0.0, %v630
        %v632 = vpop.f32.mrb[0].mxu0
        %633 = vmatprep.mubr.f32.mxu0 0.0
        %634 = vmatmul.mubr.f32.gmra.mrb[0].mxu0 %v473
        %v635 = vpop.f32.mrb[0].mxu0
        %v636 = vadd.f32 0.0, %v635
        %v637 = vpop.f32.mrb[0].mxu0
        %638 = vmatprep.mubr.f32.mxu0 0.0
        %639 = vmatmul.mubr.f32.gmra.mrb[0].mxu0 %v474
        %v640 = vpop.f32.mrb[0].mxu0
        %v641 = vadd.f32 0.0, %v640
        %v642 = vpop.f32.mrb[0].mxu0
        %643 = vmatprep.mubr.f32.mxu0 0.0
        %644 = vmatmul.mubr.f32.gmra.mrb[0].mxu0 %v475
        %v645 = vpop.f32.mrb[0].mxu0
        %v646 = vadd.f32 0.0, %v645
        %v647 = vpop.f32.mrb[0].mxu0
        %648 = vmatprep.mubr.f32.mxu0 0.0
        %649 = vmatmul.mubr.f32.gmra.mrb[0].mxu0 %v476
        %v650 = vpop.f32.mrb[0].mxu0
        %v651 = vadd.f32 0.0, %v650
        %v652 = vpop.f32.mrb[0].mxu0
        %653 = vdwg.mxu0
        %v654 = vadd.f32 %v477, %v576
        %v655 = vadd.f32 %v478, %v581
        %v656 = vadd.f32 %v479, %v586
        %v657 = vadd.f32 %v480, %v591
        %v658 = vadd.f32 %v481, %v596
        %v659 = vadd.f32 %v482, %v601
        %v660 = vadd.f32 %v483, %v606
        %v661 = vadd.f32 %v484, %v611
        %v662 = vadd.f32 %v485, %v616
        %v663 = vadd.f32 %v486, %v621
        %v664 = vadd.f32 %v487, %v626
        %v665 = vadd.f32 %v488, %v631
        %v666 = vadd.f32 %v489, %v636
        %v667 = vadd.f32 %v490, %v641
        %v668 = vadd.f32 %v491, %v646
        %v669 = vadd.f32 %v492, %v651
        %670 = vst [vmem:[#allocation2] sm:$0xff] %v654
        %671 = vst [vmem:[#allocation2 + $0x8] sm:$0xff] %v655
        %672 = vst [vmem:[#allocation2 + $0x10] sm:$0xff] %v656
        %673 = vst [vmem:[#allocation2 + $0x18] sm:$0xff] %v657
        %674 = vst [vmem:[#allocation2 + $0x20] sm:$0xff] %v658
        %675 = vst [vmem:[#allocation2 + $0x28] sm:$0xff] %v659
        %676 = vst [vmem:[#allocation2 + $0x30] sm:$0xff] %v660
        %677 = vst [vmem:[#allocation2 + $0x38] sm:$0xff] %v661
        %678 = vst [vmem:[#allocation2 + $0x40] sm:$0xff] %v662
        %679 = vst [vmem:[#allocation2 + $0x48] sm:$0xff] %v663
        %680 = vst [vmem:[#allocation2 + $0x50] sm:$0xff] %v664
        %681 = vst [vmem:[#allocation2 + $0x58] sm:$0xff] %v665
        %682 = vst [vmem:[#allocation2 + $0x60] sm:$0xff] %v666
        %683 = vst [vmem:[#allocation2 + $0x68] sm:$0xff] %v667
        %684 = vst [vmem:[#allocation2 + $0x70] sm:$0xff] %v668
        %685 = vst [vmem:[#allocation2 + $0x78] sm:$0xff] %v669
        %p686 = scmp.eq.s32.totalorder %s24, 1
        // Predicated region
        $region90: #{encoder_forward.2} parent=80 // pred_check
          %p687 = pneg %p686
        $region91: #{encoder_forward.2} parent=80 // pred_check_branch
          %689 = sbr.rel (%p687) target = $region93
        $region92: #{encoder_forward.2} parent=80 // pred_region
          %v690 = vld [vmem:[#allocation2] sm:$0xff]
          %v691 = vld [vmem:[#allocation2 + $0x8] sm:$0xff]
          %v692 = vld [vmem:[#allocation2 + $0x10] sm:$0xff]
          %v693 = vld [vmem:[#allocation2 + $0x18] sm:$0xff]
          %v694 = vld [vmem:[#allocation2 + $0x20] sm:$0xff]
          %v695 = vld [vmem:[#allocation2 + $0x28] sm:$0xff]
          %v696 = vld [vmem:[#allocation2 + $0x30] sm:$0xff]
          %v697 = vld [vmem:[#allocation2 + $0x38] sm:$0xff]
          %v698 = vld [vmem:[#allocation2 + $0x40] sm:$0xff]
          %v699 = vld [vmem:[#allocation2 + $0x48] sm:$0xff]
          %v700 = vld [vmem:[#allocation2 + $0x50] sm:$0xff]
          %v701 = vld [vmem:[#allocation2 + $0x58] sm:$0xff]
          %v702 = vld [vmem:[#allocation2 + $0x60] sm:$0xff]
          %v703 = vld [vmem:[#allocation2 + $0x68] sm:$0xff]
          %v704 = vld [vmem:[#allocation2 + $0x70] sm:$0xff]
          %v705 = vld [vmem:[#allocation2 + $0x78] sm:$0xff]
          %v706 = vld [vmem:[%s2] sm:$0xff]
          %v707 = vld [vmem:[%s2 + $0x8] sm:$0xff]
          %v708 = vld [vmem:[%s2 + $0x10] sm:$0xff]
          %v709 = vld [vmem:[%s2 + $0x18] sm:$0xff]
          %v710 = vld [vmem:[%s2 + $0x20] sm:$0xff]
          %v711 = vld [vmem:[%s2 + $0x28] sm:$0xff]
          %v712 = vld [vmem:[%s2 + $0x30] sm:$0xff]
          %v713 = vld [vmem:[%s2 + $0x38] sm:$0xff]
          %v714 = vld [vmem:[%s2 + $0x40] sm:$0xff]
          %v715 = vld [vmem:[%s2 + $0x48] sm:$0xff]
          %v716 = vld [vmem:[%s2 + $0x50] sm:$0xff]
          %v717 = vld [vmem:[%s2 + $0x58] sm:$0xff]
          %v718 = vld [vmem:[%s2 + $0x60] sm:$0xff]
          %v719 = vld [vmem:[%s2 + $0x68] sm:$0xff]
          %v720 = vld [vmem:[%s2 + $0x70] sm:$0xff]
          %v721 = vld [vmem:[%s2 + $0x78] sm:$0xff]
          %v722 = vld [vmem:[%s3] sm:$0x1]
          %v724 = vlaneseq
          %v725 = vshrl.u32 %v724, 7
          %v726 = vsub.s32 0, %v725
          %v727 = vrot.slane %v722, %v726
          %729 = vmatprep.subr.mxu0 0.0
          %730 = vmatpush1.msra.mxu0 %v706
          %731 = vmatprep.subr.mxu0 0.0
          %732 = vmatpush1.msra.mxu0 %v707
          %733 = vmatprep.subr.mxu0 0.0
          %734 = vmatpush1.msra.mxu0 %v708
          %735 = vmatprep.subr.mxu0 0.0
          %736 = vmatpush1.msra.mxu0 %v709
          %737 = vmatprep.subr.mxu0 0.0
          %738 = vmatpush1.msra.mxu0 %v710
          %739 = vmatprep.subr.mxu0 0.0
          %740 = vmatpush1.msra.mxu0 %v711
          %741 = vmatprep.subr.mxu0 0.0
          %742 = vmatpush1.msra.mxu0 %v712
          %743 = vmatprep.subr.mxu0 0.0
          %744 = vmatpush1.msra.mxu0 %v713
          %745 = vmatprep.subr.mxu0 0.0
          %746 = vmatpush1.msra.mxu0 %v714
          %747 = vmatprep.subr.mxu0 0.0
          %748 = vmatpush1.msra.mxu0 %v715
          %749 = vmatprep.subr.mxu0 0.0
          %750 = vmatpush1.msra.mxu0 %v716
          %751 = vmatprep.subr.mxu0 0.0
          %752 = vmatpush1.msra.mxu0 %v717
          %753 = vmatprep.subr.mxu0 0.0
          %754 = vmatpush1.msra.mxu0 %v718
          %755 = vmatprep.subr.mxu0 0.0
          %756 = vmatpush1.msra.mxu0 %v719
          %757 = vmatprep.subr.mxu0 0.0
          %758 = vmatpush1.msra.mxu0 %v720
          %759 = vmatprep.subr.mxu0 0.0
          %760 = vmatpush1.msra.mxu0 %v721
          %761 = vmatprep.subr.mxu0 0.0
          %762 = vmatpush1.msra.mxu0 0.0
          %763 = vmatprep.subr.mxu0 0.0
          %764 = vmatpush1.msra.mxu0 0.0
          %765 = vmatprep.subr.mxu0 0.0
          %766 = vmatpush1.msra.mxu0 0.0
          %767 = vmatprep.subr.mxu0 0.0
          %768 = vmatpush1.msra.mxu0 0.0
          %769 = vmatprep.subr.mxu0 0.0
          %770 = vmatpush1.msra.mxu0 0.0
          %771 = vmatprep.subr.mxu0 0.0
          %772 = vmatpush1.msra.mxu0 0.0
          %773 = vmatprep.subr.mxu0 0.0
          %774 = vmatpush1.msra.mxu0 0.0
          %775 = vmatprep.subr.mxu0 0.0
          %776 = vmatpush1.msra.mxu0 0.0
          %777 = vmatprep.subr.mxu0 0.0
          %778 = vmatpush1.msra.mxu0 0.0
          %779 = vmatprep.subr.mxu0 0.0
          %780 = vmatpush1.msra.mxu0 0.0
          %781 = vmatprep.subr.mxu0 0.0
          %782 = vmatpush1.msra.mxu0 0.0
          %783 = vmatprep.subr.mxu0 0.0
          %784 = vmatpush1.msra.mxu0 0.0
          %785 = vmatprep.subr.mxu0 0.0
          %786 = vmatpush1.msra.mxu0 0.0
          %787 = vmatprep.subr.mxu0 0.0
          %788 = vmatpush1.msra.mxu0 0.0
          %789 = vmatprep.subr.mxu0 0.0
          %790 = vmatpush1.msra.mxu0 0.0
          %791 = vmatprep.subr.mxu0 0.0
          %792 = vmatpush1.msra.mxu0 0.0
          %793 = vmatprep.mubr.f32.mxu0 0.0
          %794 = vmatmul.mubr.f32.gmra.mrb[0].mxu0 %v690
          %v795 = vpop.f32.mrb[0].mxu0
          %v796 = vadd.f32 %v727, %v795
          %v797 = vpop.f32.mrb[0].mxu0
          %798 = vmatprep.mubr.f32.mxu0 0.0
          %799 = vmatmul.mubr.f32.gmra.mrb[0].mxu0 %v691
          %v800 = vpop.f32.mrb[0].mxu0
          %v801 = vadd.f32 %v727, %v800
          %v802 = vpop.f32.mrb[0].mxu0
          %803 = vmatprep.mubr.f32.mxu0 0.0
          %804 = vmatmul.mubr.f32.gmra.mrb[0].mxu0 %v692
          %v805 = vpop.f32.mrb[0].mxu0
          %v806 = vadd.f32 %v727, %v805
          %v807 = vpop.f32.mrb[0].mxu0
          %808 = vmatprep.mubr.f32.mxu0 0.0
          %809 = vmatmul.mubr.f32.gmra.mrb[0].mxu0 %v693
          %v810 = vpop.f32.mrb[0].mxu0
          %v811 = vadd.f32 %v727, %v810
          %v812 = vpop.f32.mrb[0].mxu0
          %813 = vmatprep.mubr.f32.mxu0 0.0
          %814 = vmatmul.mubr.f32.gmra.mrb[0].mxu0 %v694
          %v815 = vpop.f32.mrb[0].mxu0
          %v816 = vadd.f32 %v727, %v815
          %v817 = vpop.f32.mrb[0].mxu0
          %818 = vmatprep.mubr.f32.mxu0 0.0
          %819 = vmatmul.mubr.f32.gmra.mrb[0].mxu0 %v695
          %v820 = vpop.f32.mrb[0].mxu0
          %v821 = vadd.f32 %v727, %v820
          %v822 = vpop.f32.mrb[0].mxu0
          %823 = vmatprep.mubr.f32.mxu0 0.0
          %824 = vmatmul.mubr.f32.gmra.mrb[0].mxu0 %v696
          %v825 = vpop.f32.mrb[0].mxu0
          %v826 = vadd.f32 %v727, %v825
          %v827 = vpop.f32.mrb[0].mxu0
          %828 = vmatprep.mubr.f32.mxu0 0.0
          %829 = vmatmul.mubr.f32.gmra.mrb[0].mxu0 %v697
          %v830 = vpop.f32.mrb[0].mxu0
          %v831 = vadd.f32 %v727, %v830
          %v832 = vpop.f32.mrb[0].mxu0
          %833 = vmatprep.mubr.f32.mxu0 0.0
          %834 = vmatmul.mubr.f32.gmra.mrb[0].mxu0 %v698
          %v835 = vpop.f32.mrb[0].mxu0
          %v836 = vadd.f32 %v727, %v835
          %v837 = vpop.f32.mrb[0].mxu0
          %838 = vmatprep.mubr.f32.mxu0 0.0
          %839 = vmatmul.mubr.f32.gmra.mrb[0].mxu0 %v699
          %v840 = vpop.f32.mrb[0].mxu0
          %v841 = vadd.f32 %v727, %v840
          %v842 = vpop.f32.mrb[0].mxu0
          %843 = vmatprep.mubr.f32.mxu0 0.0
          %844 = vmatmul.mubr.f32.gmra.mrb[0].mxu0 %v700
          %v845 = vpop.f32.mrb[0].mxu0
          %v846 = vadd.f32 %v727, %v845
          %v847 = vpop.f32.mrb[0].mxu0
          %848 = vmatprep.mubr.f32.mxu0 0.0
          %849 = vmatmul.mubr.f32.gmra.mrb[0].mxu0 %v701
          %v850 = vpop.f32.mrb[0].mxu0
          %v851 = vadd.f32 %v727, %v850
          %v852 = vpop.f32.mrb[0].mxu0
          %853 = vmatprep.mubr.f32.mxu0 0.0
          %854 = vmatmul.mubr.f32.gmra.mrb[0].mxu0 %v702
          %v855 = vpop.f32.mrb[0].mxu0
          %v856 = vadd.f32 %v727, %v855
          %v857 = vpop.f32.mrb[0].mxu0
          %858 = vmatprep.mubr.f32.mxu0 0.0
          %859 = vmatmul.mubr.f32.gmra.mrb[0].mxu0 %v703
          %v860 = vpop.f32.mrb[0].mxu0
          %v861 = vadd.f32 %v727, %v860
          %v862 = vpop.f32.mrb[0].mxu0
          %863 = vmatprep.mubr.f32.mxu0 0.0
          %864 = vmatmul.mubr.f32.gmra.mrb[0].mxu0 %v704
          %v865 = vpop.f32.mrb[0].mxu0
          %v866 = vadd.f32 %v727, %v865
          %v867 = vpop.f32.mrb[0].mxu0
          %868 = vmatprep.mubr.f32.mxu0 0.0
          %869 = vmatmul.mubr.f32.gmra.mrb[0].mxu0 %v705
          %v870 = vpop.f32.mrb[0].mxu0
          %v871 = vadd.f32 %v727, %v870
          %v872 = vpop.f32.mrb[0].mxu0
          %873 = vdwg.mxu0
          %v874 = vmax.f32 %v796, 0.0
          %v875 = vmax.f32 %v801, 0.0
          %v876 = vmax.f32 %v806, 0.0
          %v877 = vmax.f32 %v811, 0.0
          %v878 = vmax.f32 %v816, 0.0
          %v879 = vmax.f32 %v821, 0.0
          %v880 = vmax.f32 %v826, 0.0
          %v881 = vmax.f32 %v831, 0.0
          %v882 = vmax.f32 %v836, 0.0
          %v883 = vmax.f32 %v841, 0.0
          %v884 = vmax.f32 %v846, 0.0
          %v885 = vmax.f32 %v851, 0.0
          %v886 = vmax.f32 %v856, 0.0
          %v887 = vmax.f32 %v861, 0.0
          %v888 = vmax.f32 %v866, 0.0
          %v889 = vmax.f32 %v871, 0.0
          %v890 = vld [vmem:[%s4] sm:$0xff]
          %v891 = vld [vmem:[%s4 + $0x8] sm:$0xff]
          %v892 = vld [vmem:[%s4 + $0x10] sm:$0xff]
          %v893 = vld [vmem:[%s4 + $0x18] sm:$0xff]
          %v894 = vld [vmem:[%s4 + $0x20] sm:$0xff]
          %v895 = vld [vmem:[%s4 + $0x28] sm:$0xff]
          %v896 = vld [vmem:[%s4 + $0x30] sm:$0xff]
          %v897 = vld [vmem:[%s4 + $0x38] sm:$0xff]
          %v898 = vld [vmem:[%s4 + $0x40] sm:$0xff]
          %v899 = vld [vmem:[%s4 + $0x48] sm:$0xff]
          %v900 = vld [vmem:[%s4 + $0x50] sm:$0xff]
          %v901 = vld [vmem:[%s4 + $0x58] sm:$0xff]
          %v902 = vld [vmem:[%s4 + $0x60] sm:$0xff]
          %v903 = vld [vmem:[%s4 + $0x68] sm:$0xff]
          %v904 = vld [vmem:[%s4 + $0x70] sm:$0xff]
          %v905 = vld [vmem:[%s4 + $0x78] sm:$0xff]
          %v906 = vld [vmem:[%s5] sm:$0x1]
          %v908 = vlaneseq
          %v909 = vshrl.u32 %v908, 7
          %v910 = vsub.s32 0, %v909
          %v911 = vrot.slane %v906, %v910
          %913 = vmatprep.subr.mxu0 0.0
          %914 = vmatpush1.msra.mxu0 %v890
          %915 = vmatprep.subr.mxu0 0.0
          %916 = vmatpush1.msra.mxu0 %v891
          %917 = vmatprep.subr.mxu0 0.0
          %918 = vmatpush1.msra.mxu0 %v892
          %919 = vmatprep.subr.mxu0 0.0
          %920 = vmatpush1.msra.mxu0 %v893
          %921 = vmatprep.subr.mxu0 0.0
          %922 = vmatpush1.msra.mxu0 %v894
          %923 = vmatprep.subr.mxu0 0.0
          %924 = vmatpush1.msra.mxu0 %v895
          %925 = vmatprep.subr.mxu0 0.0
          %926 = vmatpush1.msra.mxu0 %v896
          %927 = vmatprep.subr.mxu0 0.0
          %928 = vmatpush1.msra.mxu0 %v897
          %929 = vmatprep.subr.mxu0 0.0
          %930 = vmatpush1.msra.mxu0 %v898
          %931 = vmatprep.subr.mxu0 0.0
          %932 = vmatpush1.msra.mxu0 %v899
          %933 = vmatprep.subr.mxu0 0.0
          %934 = vmatpush1.msra.mxu0 %v900
          %935 = vmatprep.subr.mxu0 0.0
          %936 = vmatpush1.msra.mxu0 %v901
          %937 = vmatprep.subr.mxu0 0.0
          %938 = vmatpush1.msra.mxu0 %v902
          %939 = vmatprep.subr.mxu0 0.0
          %940 = vmatpush1.msra.mxu0 %v903
          %941 = vmatprep.subr.mxu0 0.0
          %942 = vmatpush1.msra.mxu0 %v904
          %943 = vmatprep.subr.mxu0 0.0
          %944 = vmatpush1.msra.mxu0 %v905
          %945 = vmatprep.subr.mxu0 0.0
          %946 = vmatpush1.msra.mxu0 0.0
          %947 = vmatprep.subr.mxu0 0.0
          %948 = vmatpush1.msra.mxu0 0.0
          %949 = vmatprep.subr.mxu0 0.0
          %950 = vmatpush1.msra.mxu0 0.0
          %951 = vmatprep.subr.mxu0 0.0
          %952 = vmatpush1.msra.mxu0 0.0
          %953 = vmatprep.subr.mxu0 0.0
          %954 = vmatpush1.msra.mxu0 0.0
          %955 = vmatprep.subr.mxu0 0.0
          %956 = vmatpush1.msra.mxu0 0.0
          %957 = vmatprep.subr.mxu0 0.0
          %958 = vmatpush1.msra.mxu0 0.0
          %959 = vmatprep.subr.mxu0 0.0
          %960 = vmatpush1.msra.mxu0 0.0
          %961 = vmatprep.subr.mxu0 0.0
          %962 = vmatpush1.msra.mxu0 0.0
          %963 = vmatprep.subr.mxu0 0.0
          %964 = vmatpush1.msra.mxu0 0.0
          %965 = vmatprep.subr.mxu0 0.0
          %966 = vmatpush1.msra.mxu0 0.0
          %967 = vmatprep.subr.mxu0 0.0
          %968 = vmatpush1.msra.mxu0 0.0
          %969 = vmatprep.subr.mxu0 0.0
          %970 = vmatpush1.msra.mxu0 0.0
          %971 = vmatprep.subr.mxu0 0.0
          %972 = vmatpush1.msra.mxu0 0.0
          %973 = vmatprep.subr.mxu0 0.0
          %974 = vmatpush1.msra.mxu0 0.0
          %975 = vmatprep.subr.mxu0 0.0
          %976 = vmatpush1.msra.mxu0 0.0
          %977 = vmatprep.mubr.f32.mxu0 0.0
          %978 = vmatmul.mubr.f32.gmra.mrb[0].mxu0 %v874
          %v979 = vpop.f32.mrb[0].mxu0
          %v980 = vadd.f32 %v911, %v979
          %v981 = vpop.f32.mrb[0].mxu0
          %982 = vmatprep.mubr.f32.mxu0 0.0
          %983 = vmatmul.mubr.f32.gmra.mrb[0].mxu0 %v875
          %v984 = vpop.f32.mrb[0].mxu0
          %v985 = vadd.f32 %v911, %v984
          %v986 = vpop.f32.mrb[0].mxu0
          %987 = vmatprep.mubr.f32.mxu0 0.0
          %988 = vmatmul.mubr.f32.gmra.mrb[0].mxu0 %v876
          %v989 = vpop.f32.mrb[0].mxu0
          %v990 = vadd.f32 %v911, %v989
          %v991 = vpop.f32.mrb[0].mxu0
          %992 = vmatprep.mubr.f32.mxu0 0.0
          %993 = vmatmul.mubr.f32.gmra.mrb[0].mxu0 %v877
          %v994 = vpop.f32.mrb[0].mxu0
          %v995 = vadd.f32 %v911, %v994
          %v996 = vpop.f32.mrb[0].mxu0
          %997 = vmatprep.mubr.f32.mxu0 0.0
          %998 = vmatmul.mubr.f32.gmra.mrb[0].mxu0 %v878
          %v999 = vpop.f32.mrb[0].mxu0
          %v1000 = vadd.f32 %v911, %v999
          %v1001 = vpop.f32.mrb[0].mxu0
          %1002 = vmatprep.mubr.f32.mxu0 0.0
          %1003 = vmatmul.mubr.f32.gmra.mrb[0].mxu0 %v879
          %v1004 = vpop.f32.mrb[0].mxu0
          %v1005 = vadd.f32 %v911, %v1004
          %v1006 = vpop.f32.mrb[0].mxu0
          %1007 = vmatprep.mubr.f32.mxu0 0.0
          %1008 = vmatmul.mubr.f32.gmra.mrb[0].mxu0 %v880
          %v1009 = vpop.f32.mrb[0].mxu0
          %v1010 = vadd.f32 %v911, %v1009
          %v1011 = vpop.f32.mrb[0].mxu0
          %1012 = vmatprep.mubr.f32.mxu0 0.0
          %1013 = vmatmul.mubr.f32.gmra.mrb[0].mxu0 %v881
          %v1014 = vpop.f32.mrb[0].mxu0
          %v1015 = vadd.f32 %v911, %v1014
          %v1016 = vpop.f32.mrb[0].mxu0
          %1017 = vmatprep.mubr.f32.mxu0 0.0
          %1018 = vmatmul.mubr.f32.gmra.mrb[0].mxu0 %v882
          %v1019 = vpop.f32.mrb[0].mxu0
          %v1020 = vadd.f32 %v911, %v1019
          %v1021 = vpop.f32.mrb[0].mxu0
          %1022 = vmatprep.mubr.f32.mxu0 0.0
          %1023 = vmatmul.mubr.f32.gmra.mrb[0].mxu0 %v883
          %v1024 = vpop.f32.mrb[0].mxu0
          %v1025 = vadd.f32 %v911, %v1024
          %v1026 = vpop.f32.mrb[0].mxu0
          %1027 = vmatprep.mubr.f32.mxu0 0.0
          %1028 = vmatmul.mubr.f32.gmra.mrb[0].mxu0 %v884
          %v1029 = vpop.f32.mrb[0].mxu0
          %v1030 = vadd.f32 %v911, %v1029
          %v1031 = vpop.f32.mrb[0].mxu0
          %1032 = vmatprep.mubr.f32.mxu0 0.0
          %1033 = vmatmul.mubr.f32.gmra.mrb[0].mxu0 %v885
          %v1034 = vpop.f32.mrb[0].mxu0
          %v1035 = vadd.f32 %v911, %v1034
          %v1036 = vpop.f32.mrb[0].mxu0
          %1037 = vmatprep.mubr.f32.mxu0 0.0
          %1038 = vmatmul.mubr.f32.gmra.mrb[0].mxu0 %v886
          %v1039 = vpop.f32.mrb[0].mxu0
          %v1040 = vadd.f32 %v911, %v1039
          %v1041 = vpop.f32.mrb[0].mxu0
          %1042 = vmatprep.mubr.f32.mxu0 0.0
          %1043 = vmatmul.mubr.f32.gmra.mrb[0].mxu0 %v887
          %v1044 = vpop.f32.mrb[0].mxu0
          %v1045 = vadd.f32 %v911, %v1044
          %v1046 = vpop.f32.mrb[0].mxu0
          %1047 = vmatprep.mubr.f32.mxu0 0.0
          %1048 = vmatmul.mubr.f32.gmra.mrb[0].mxu0 %v888
          %v1049 = vpop.f32.mrb[0].mxu0
          %v1050 = vadd.f32 %v911, %v1049
          %v1051 = vpop.f32.mrb[0].mxu0
          %1052 = vmatprep.mubr.f32.mxu0 0.0
          %1053 = vmatmul.mubr.f32.gmra.mrb[0].mxu0 %v889
          %v1054 = vpop.f32.mrb[0].mxu0
          %v1055 = vadd.f32 %v911, %v1054
          %v1056 = vpop.f32.mrb[0].mxu0
          %1057 = vdwg.mxu0
          %v1058 = vmax.f32 %v980, 0.0
          %v1059 = vmax.f32 %v985, 0.0
          %v1060 = vmax.f32 %v990, 0.0
          %v1061 = vmax.f32 %v995, 0.0
          %v1062 = vmax.f32 %v1000, 0.0
          %v1063 = vmax.f32 %v1005, 0.0
          %v1064 = vmax.f32 %v1010, 0.0
          %v1065 = vmax.f32 %v1015, 0.0
          %v1066 = vmax.f32 %v1020, 0.0
          %v1067 = vmax.f32 %v1025, 0.0
          %v1068 = vmax.f32 %v1030, 0.0
          %v1069 = vmax.f32 %v1035, 0.0
          %v1070 = vmax.f32 %v1040, 0.0
          %v1071 = vmax.f32 %v1045, 0.0
          %v1072 = vmax.f32 %v1050, 0.0
          %v1073 = vmax.f32 %v1055, 0.0
          %1074 = vst [vmem:[%s423] sm:$0xff] %v1058
          %1075 = vst [vmem:[%s423 + $0x8] sm:$0xff] %v1059
          %1076 = vst [vmem:[%s423 + $0x10] sm:$0xff] %v1060
          %1077 = vst [vmem:[%s423 + $0x18] sm:$0xff] %v1061
          %1078 = vst [vmem:[%s423 + $0x20] sm:$0xff] %v1062
          %1079 = vst [vmem:[%s423 + $0x28] sm:$0xff] %v1063
          %1080 = vst [vmem:[%s423 + $0x30] sm:$0xff] %v1064
          %1081 = vst [vmem:[%s423 + $0x38] sm:$0xff] %v1065
          %1082 = vst [vmem:[%s423 + $0x40] sm:$0xff] %v1066
          %1083 = vst [vmem:[%s423 + $0x48] sm:$0xff] %v1067
          %1084 = vst [vmem:[%s423 + $0x50] sm:$0xff] %v1068
          %1085 = vst [vmem:[%s423 + $0x58] sm:$0xff] %v1069
          %1086 = vst [vmem:[%s423 + $0x60] sm:$0xff] %v1070
          %1087 = vst [vmem:[%s423 + $0x68] sm:$0xff] %v1071
          %1088 = vst [vmem:[%s423 + $0x70] sm:$0xff] %v1072
          %1089 = vst [vmem:[%s423 + $0x78] sm:$0xff] %v1073
        $region93: #{encoder_forward.2} parent=80 // pred_fallthru
          _
        %s1090 = smul.u32 16, %s23
        %p1091 = scmp.lt.s32.totalorder %s22, 1
        %s1092 = scalar_select %p1091, %s22, 1
        %p1093 = scmp.lt.s32.totalorder %s1090, 31
        %s1094 = scalar_select %p1093, %s1090, 31
        %s1095 = smul.addr %s1092, 32
        %s1096 = sadd.s32 %s1094, %s1095
        %s1097 = smul.addr %s1096, 8
        %s1098 = scalar_lea.vmem %s6, %s1097
        // Predicated region
        $region94: #{encoder_forward.2} parent=80 // pred_check
          %p1099 = pneg %p196
        $region95: #{encoder_forward.2} parent=80 // pred_check_branch
          %1101 = sbr.rel (%p1099) target = $region97
        $region96: #{encoder_forward.2} parent=80 // pred_region
          %s1102 = smul.u32 16, %s23
        $region97: #{encoder_forward.2} parent=80 // pred_fallthru
          _
      $region81: #{encoder_forward.2} parent=5 // pred_fallthru
        _
      %p1103 = scmp.le.s32.totalorder 2, %s12
      // Predicated region
      $region98: #{encoder_forward.2} parent=5 // pred_check
        %p1104 = pneg %p1103
      $region99: #{encoder_forward.2} parent=5 // pred_check_branch
        %1106 = sbr.rel (%p1104) target = $region101
      $region100: #{encoder_forward.2} parent=5 // pred_region
        %s1107 = ssub.s32 %s12, 2
        // Predicated region
        $region102: #{encoder_forward.2} parent=100 // pred_check
          %p1108 = pneg %p202
        $region103: #{encoder_forward.2} parent=100 // pred_check_branch
          %1110 = sbr.rel (%p1108) target = $region105
        $region104: #{encoder_forward.2} parent=100 // pred_region
          %s1111 = smul.u32 16, %s26
          %p1112 = scmp.lt.s32.totalorder %s25, 1
          %s1113 = scalar_select %p1112, %s25, 1
          %p1114 = scmp.lt.s32.totalorder %s1111, 31
          %s1115 = scalar_select %p1114, %s1111, 31
          %s1116 = smul.addr %s1113, 32
          %s1117 = sadd.s32 %s1115, %s1116
          %s1118 = smul.addr %s1117, 8
          %s1119 = scalar_lea.vmem %s6, %s1118
        $region105: #{encoder_forward.2} parent=100 // pred_fallthru
          _
      $region101: #{encoder_forward.2} parent=5 // pred_fallthru
        _
    $region6: #{encoder_forward.2} parent=1 // loop_footer
      %s16 = sadd.s32 1, %s12
    $region7: #{encoder_forward.2} parent=1 // loop_footer_branch
      %11 = sbr.rel target = $region3
    $region8: #{encoder_forward.2} parent=1 // loop_exit
      _

</llo_original>
